<compile_context>
chip_gen: v5e
topology: v5e:2x2
jax: 0.10.0
libtpu: 0.0.40
codegen_flags: <defaults>
</compile_context>

<pallas_src>
import functools
import math

import jax
import jax.numpy as jnp
from jax.experimental import pallas as pl
from jax.experimental.pallas import tpu as pltpu


def _layer_norm(x, gamma, beta, eps=1e-5):
    mean = jnp.mean(x, axis=-1, keepdims=True)
    var = jnp.mean((x - mean) ** 2, axis=-1, keepdims=True)
    return (x - mean) * jax.lax.rsqrt(var + eps) * gamma + beta


def _softmax_last(x):
    # Manual max-subtract softmax; normalization is a reciprocal-multiply.
    # (pl.reciprocal(..., approx=True) would push the divide to the EUP for a
    #  few-% win at slightly looser numerics.)
    m = jnp.max(x, axis=-1, keepdims=True)
    e = jnp.exp(x - m)
    return e * pl.reciprocal(jnp.sum(e, axis=-1, keepdims=True), approx=False)


def _neg_softplus(x):
    # -softplus(x), overflow-safe for large |x|.
    return -(jnp.maximum(x, 0.0) + jnp.log1p(jnp.exp(-jnp.abs(x))))


def transformer_layer_kernel(
    q_in_ref, k_in_ref, v_in_ref,
    wk_ref, bk_ref, wv_ref, bv_ref, gammas_ref,
    wo_ref, bo_ref,
    ln1_g_ref, ln1_b_ref,
    w1_ref, b1_ref, w2_ref, b2_ref,
    ln2_g_ref, ln2_b_ref,
    out_ref,
    *, n_heads, d_k, seq, tq, mask_int, zero_pad, apply_pos,
):
    f32 = jnp.float32
    bf16 = jnp.bfloat16

    qi = pl.program_id(1)               # query-block index

    q_in = q_in_ref[0]                  # (tq,  d_model) f32
    k_in = k_in_ref[0]                  # (seq, d_model) f32
    v_in = v_in_ref[0]                  # (seq, d_model) f32

    # ---- batched-over-heads QKV projections (bf16 MXU, f32 accumulate) ----
    # kq_same == True (AKT default): q uses k_linear.  Dropout = identity.
    wk = wk_ref[...].astype(bf16)       # (h, d_model, d_k)
    wv = wv_ref[...].astype(bf16)
    q_b = jnp.broadcast_to(q_in.astype(bf16), (n_heads, tq, q_in.shape[-1]))
    k_b = jnp.broadcast_to(k_in.astype(bf16), (n_heads, seq, k_in.shape[-1]))
    v_b = jnp.broadcast_to(v_in.astype(bf16), (n_heads, seq, v_in.shape[-1]))

    q3 = jnp.einsum("hsd,hdk->hsk", q_b, wk, preferred_element_type=f32) + bk_ref[...]
    k3 = jnp.einsum("hsd,hdk->hsk", k_b, wk, preferred_element_type=f32) + bk_ref[...]
    v3 = jnp.einsum("hsd,hdk->hsk", v_b, wv, preferred_element_type=f32) + bv_ref[...]

    # ---- in-kernel causal mask / position tensors (computed once) ----
    row_l = jax.lax.broadcasted_iota(jnp.int32, (tq, seq), 0)
    col = jax.lax.broadcasted_iota(jnp.int32, (tq, seq), 1)
    row_g = row_l + qi * tq
    allowed = col <= (row_g + (mask_int - 1))        # bool (tq, seq)
    allowed_f = allowed.astype(f32)
    pos_eff = jnp.abs(col - row_g).astype(f32)       # |x1 - x2|

    neg = f32(-1e32)
    scale = f32(1.0 / math.sqrt(d_k))

    # ---- attention scores (bf16 MXU, f32 accumulate) ----
    scores = jnp.einsum("hqd,hkd->hqk", q3.astype(bf16), k3.astype(bf16),
                        preferred_element_type=f32) * scale      # (h, tq, seq)

    # ---- distance-decay statistics (torch.no_grad() branch) ----
    # Fully-masked rows (e.g. global row 0 under the strictly-causal mask) give a
    # uniform softmax from all -1e32 logits; multiplying by the mask then zeroes
    # them, exactly matching the PyTorch reference (the row is later zero_pad'ed).
    s_masked = jnp.where(allowed, scores, neg)
    s_soft = _softmax_last(s_masked) * allowed_f                  # (h, tq, seq)

    # strict suffix sum along k:  suffix[i, j] = sum_{k > j} s_soft[i, k]
    #   == disttotal - distcum of the reference.
    kk = jax.lax.broadcasted_iota(jnp.int32, (seq, seq), 0)
    jj = jax.lax.broadcasted_iota(jnp.int32, (seq, seq), 1)
    tri_gt = (kk > jj).astype(bf16)                               # exact in bf16
    suffix = jnp.einsum("hqk,hkj->hqj",
                        s_soft.astype(bf16),
                        jnp.broadcast_to(tri_gt, (n_heads, seq, seq)),
                        preferred_element_type=f32)

    dist = jnp.sqrt(jnp.maximum(suffix * pos_eff, 0.0))           # (h, tq, seq)

    neg_sp_gamma = _neg_softplus(gammas_ref[...])                 # (h, 1, 1)
    total_effect = jnp.clip(jnp.exp(dist * neg_sp_gamma), 1e-5, 1e5)

    scores = jnp.where(allowed, scores * total_effect, neg)
    probs = _softmax_last(scores)                                 # (h, tq, seq)
    if zero_pad:
        probs = jnp.where(row_g == 0, 0.0, probs)

    attn3 = jnp.einsum("hqk,hkd->hqd", probs.astype(bf16), v3.astype(bf16),
                       preferred_element_type=f32)                # (h, tq, d_k)

    # ---- output projection: per-head (d_k, d_model) slabs, summed over heads ----
    wo = wo_ref[...].astype(bf16)                                 # (h, d_k, d_model)
    attn = jnp.sum(jnp.einsum("hqd,hdm->hqm", attn3.astype(bf16), wo,
                              preferred_element_type=f32), axis=0) + bo_ref[...]

    x = q_in + attn
    x = _layer_norm(x, ln1_g_ref[...], ln1_b_ref[...])

    if apply_pos:
        h1 = jnp.maximum(
            jnp.dot(x.astype(bf16), w1_ref[...].astype(bf16),
                    preferred_element_type=f32) + b1_ref[...], 0.0)
        h2 = jnp.dot(h1.astype(bf16), w2_ref[...].astype(bf16),
                     preferred_element_type=f32) + b2_ref[...]
        x = _layer_norm(x + h2, ln2_g_ref[...], ln2_b_ref[...])

    out_ref[0] = x


def transformer_layer(mask_int, query, key, values, params, *, n_heads, d_ff,
                      apply_pos=True, tq=None):
    bs, seq, d_model = query.shape
    d_k = d_model // n_heads
    zero_pad = (mask_int == 0)

    # Query-block size: largest divisor of seq (multiple of 8 when possible).
    if tq is None:
        tq = seq
        for cand in (512, 256, 128, 64, 32, 16, 8):
            if seq % cand == 0:
                tq = cand
                break
    n_qb = seq // tq

    # Per-head weight layouts (heads on the leading axis) prepared outside the kernel.
    def split_w_in(w):      # (d_model, d_model) -> (n_heads, d_model, d_k)
        return w.reshape(d_model, n_heads, d_k).transpose(1, 0, 2)

    def split_b(b):         # (1, d_model) -> (n_heads, 1, d_k)
        return b.reshape(n_heads, d_k)[:, None, :]

    wk3 = split_w_in(params["wk"]); bk3 = split_b(params["bk"])
    wv3 = split_w_in(params["wv"]); bv3 = split_b(params["bv"])
    wo3 = params["wo"].reshape(n_heads, d_k, d_model)

    kernel = functools.partial(
        transformer_layer_kernel,
        n_heads=n_heads, d_k=d_k, seq=seq, tq=tq, mask_int=mask_int,
        zero_pad=zero_pad, apply_pos=apply_pos)

    def rep(shape):
        return pl.BlockSpec(shape, lambda b, q, _n=len(shape): (0,) * _n)

    q_spec = pl.BlockSpec((1, tq, d_model), lambda b, q: (b, q, 0))
    kv_spec = pl.BlockSpec((1, seq, d_model), lambda b, q: (b, 0, 0))

    return pl.pallas_call(
        kernel,
        out_shape=jax.ShapeDtypeStruct((bs, seq, d_model), jnp.float32),
        grid=(bs, n_qb),
        in_specs=[
            q_spec, kv_spec, kv_spec,
            rep((n_heads, d_model, d_k)), rep((n_heads, 1, d_k)),   # k_linear
            rep((n_heads, d_model, d_k)), rep((n_heads, 1, d_k)),   # v_linear
            rep((n_heads, 1, 1)),                                   # gammas
            rep((n_heads, d_k, d_model)), rep((1, d_model)),        # out_proj
            rep((1, d_model)), rep((1, d_model)),                   # layer_norm1
            rep((d_model, d_ff)), rep((1, d_ff)),                   # linear1
            rep((d_ff, d_model)), rep((1, d_model)),                # linear2
            rep((1, d_model)), rep((1, d_model)),                   # layer_norm2
        ],
        out_specs=q_spec,
        compiler_params=pltpu.CompilerParams(
            dimension_semantics=("parallel", "parallel"),
            vmem_limit_bytes=48 * 1024 * 1024),
    )(query, key, values,
      wk3, bk3, wv3, bv3, params["gammas"],
      wo3, params["bo"], params["ln1_g"], params["ln1_b"],
      params["w1"], params["b1"], params["w2"], params["b2"],
      params["ln2_g"], params["ln2_b"])


def reference(mask_int, query, key, values, params, *, n_heads, apply_pos=True,
              matmul_dtype=jnp.float32):
    """Pure-JAX replica of the PyTorch forward (eval mode).

    matmul_dtype=float32  -> plain f32 reference of the torch module.
    matmul_dtype=bfloat16 -> same bf16-input / f32-accumulate matmul recipe as the kernel.
    """
    bs, seq, d_model = query.shape
    d_k = d_model // n_heads
    f32 = jnp.float32
    md = matmul_dtype
    allowed = jnp.tril(jnp.ones((seq, seq), f32), k=mask_int - 1)
    mask4 = allowed[None, None]
    neg = f32(-1e32)

    def linear(x, w, b):
        return jnp.einsum("...d,df->...f", x.astype(md), w.astype(md),
                          preferred_element_type=f32) + b

    def split_heads(x):
        return x.reshape(bs, seq, n_heads, d_k).transpose(0, 2, 1, 3)

    q = split_heads(linear(query, params["wk"], params["bk"]))
    k = split_heads(linear(key, params["wk"], params["bk"]))
    v = split_heads(linear(values, params["wv"], params["bv"]))

    scores = jnp.einsum("bhqd,bhkd->bhqk", q.astype(md), k.astype(md),
                        preferred_element_type=f32) / math.sqrt(d_k)
    s_soft = jax.nn.softmax(jnp.where(mask4 == 0, neg, scores), -1) * mask4
    s_stats = s_soft.astype(md).astype(f32)
    distcum = jnp.cumsum(s_stats, -1)
    disttotal = jnp.sum(s_stats, -1, keepdims=True)
    idx = jnp.arange(seq)
    pos = jnp.abs(idx[None, :] - idx[:, None]).astype(f32)[None, None]
    dist = jnp.sqrt(jnp.maximum((disttotal - distcum) * pos, 0.0))
    gam = -jax.nn.softplus(params["gammas"]).reshape(1, n_heads, 1, 1)
    total_effect = jnp.clip(jnp.exp(dist * gam), 1e-5, 1e5)
    scores = jnp.where(mask4 == 0, neg, scores * total_effect)
    scores = jax.nn.softmax(scores, -1)
    if mask_int == 0:
        scores = scores.at[:, :, 0, :].set(0.0)
    attn = jnp.einsum("bhqk,bhkd->bhqd", scores.astype(md), v.astype(md),
                      preferred_element_type=f32)
    attn = attn.transpose(0, 2, 1, 3).reshape(bs, seq, d_model)
    attn = linear(attn, params["wo"], params["bo"])

    x = query + attn
    x = _layer_norm(x, params["ln1_g"], params["ln1_b"])
    if apply_pos:
        h1 = jnp.maximum(linear(x, params["w1"], params["b1"]), 0.0)
        h2 = linear(h1, params["w2"], params["b2"])
        x = _layer_norm(x + h2, params["ln2_g"], params["ln2_b"])
    return x


if __name__ == "__main__":
    bs, seq, d_model, n_heads, d_ff = 2, 8, 32, 4, 64

    key0 = jax.random.PRNGKey(0)
    keys = jax.random.split(key0, 16)

    def xavier(k, shape):
        bound = math.sqrt(6.0 / (shape[0] + shape[1]))
        return jax.random.uniform(k, shape, jnp.float32, -bound, bound)

    params = {
        "wk": xavier(keys[0], (d_model, d_model)), "bk": jnp.zeros((1, d_model), jnp.float32),
        "wv": xavier(keys[1], (d_model, d_model)), "bv": jnp.zeros((1, d_model), jnp.float32),
        "wo": xavier(keys[2], (d_model, d_model)), "bo": jnp.zeros((1, d_model), jnp.float32),
        # gammas: torch.zeros(n_heads,1,1) then xavier_uniform_ -> bound sqrt(3)
        "gammas": jax.random.uniform(keys[3], (n_heads, 1, 1), jnp.float32,
                                     -math.sqrt(3.0), math.sqrt(3.0)),
        "ln1_g": jnp.ones((1, d_model), jnp.float32), "ln1_b": jnp.zeros((1, d_model), jnp.float32),
        "w1": xavier(keys[4], (d_model, d_ff)),
        "b1": jax.random.uniform(keys[5], (1, d_ff), jnp.float32, -0.1, 0.1),
        "w2": xavier(keys[6], (d_ff, d_model)),
        "b2": jax.random.uniform(keys[7], (1, d_model), jnp.float32, -0.1, 0.1),
        "ln2_g": jnp.ones((1, d_model), jnp.float32), "ln2_b": jnp.zeros((1, d_model), jnp.float32),
    }

    query = jax.random.normal(keys[8], (bs, seq, d_model), jnp.float32)
    key_in = jax.random.normal(keys[9], (bs, seq, d_model), jnp.float32)
    values = jax.random.normal(keys[10], (bs, seq, d_model), jnp.float32)

    mask_int = 0  # AKT "mask == 0" branch: strictly-causal mask + zero_pad first row

    out = transformer_layer(mask_int, query, key_in, values, params,
                            n_heads=n_heads, d_ff=d_ff, apply_pos=True)
    out = jax.block_until_ready(out)

    assert out.shape == (bs, seq, d_model)
    assert bool(jnp.all(jnp.isfinite(out)))

    # Tight check vs a JAX reference using the same bf16-matmul / f32-accumulate
    # recipe as the kernel; loose check vs the plain-f32 PyTorch-equivalent reference
    # (bounds the mixed-precision deviation).
    ref_bf16 = reference(mask_int, query, key_in, values, params, n_heads=n_heads,
                         apply_pos=True, matmul_dtype=jnp.bfloat16)
    ref_f32 = reference(mask_int, query, key_in, values, params, n_heads=n_heads,
                        apply_pos=True, matmul_dtype=jnp.float32)
    err_bf16 = float(jnp.max(jnp.abs(out - ref_bf16)))
    err_f32 = float(jnp.max(jnp.abs(out - ref_f32)))
    assert err_bf16 < 2e-3, f"mismatch vs bf16-matmul reference: {err_bf16}"
    assert err_f32 < 1e-1, f"mismatch vs f32 reference: {err_f32}"
    print("KERNEL_OK")
</pallas_src>

<mosaic_0001>
module attributes {stable_mosaic.version = 11 : i64} {
  func.func @transformer_layer_kernel(%arg0: i32, %arg1: i32, %arg2: memref<1x8x32xf32, #tpu.memory_space<vmem>>, %arg3: memref<1x8x32xf32, #tpu.memory_space<vmem>>, %arg4: memref<1x8x32xf32, #tpu.memory_space<vmem>>, %arg5: memref<4x32x8xf32, #tpu.memory_space<vmem>>, %arg6: memref<4x1x8xf32, #tpu.memory_space<vmem>>, %arg7: memref<4x32x8xf32, #tpu.memory_space<vmem>>, %arg8: memref<4x1x8xf32, #tpu.memory_space<vmem>>, %arg9: memref<4x1x1xf32, #tpu.memory_space<vmem>>, %arg10: memref<4x8x32xf32, #tpu.memory_space<vmem>>, %arg11: memref<1x32xf32, #tpu.memory_space<vmem>>, %arg12: memref<1x32xf32, #tpu.memory_space<vmem>>, %arg13: memref<1x32xf32, #tpu.memory_space<vmem>>, %arg14: memref<32x64xf32, #tpu.memory_space<vmem>>, %arg15: memref<1x64xf32, #tpu.memory_space<vmem>>, %arg16: memref<64x32xf32, #tpu.memory_space<vmem>>, %arg17: memref<1x32xf32, #tpu.memory_space<vmem>>, %arg18: memref<1x32xf32, #tpu.memory_space<vmem>>, %arg19: memref<1x32xf32, #tpu.memory_space<vmem>>, %arg20: memref<1x8x32xf32, #tpu.memory_space<vmem>>) attributes {dimension_semantics = [#tpu.dimension_semantics<parallel>, #tpu.dimension_semantics<parallel>], iteration_bounds = array<i64: 2, 1>, scalar_prefetch = 0 : i64, scratch_operands = 0 : i64, tpu.core_type = #tpu.core_type<tc>, window_params = [{transform_indices = @transform_0, window_bounds = array<i64: 1, 8, 32>}, {transform_indices = @transform_1, window_bounds = array<i64: 1, 8, 32>}, {transform_indices = @transform_2, window_bounds = array<i64: 1, 8, 32>}, {pipeline_mode = #tpu.pipeline_mode<synchronous>, transform_indices = @transform_3, window_bounds = array<i64: 4, 32, 8>}, {pipeline_mode = #tpu.pipeline_mode<synchronous>, transform_indices = @transform_4, window_bounds = array<i64: 4, 1, 8>}, {pipeline_mode = #tpu.pipeline_mode<synchronous>, transform_indices = @transform_5, window_bounds = array<i64: 4, 32, 8>}, {pipeline_mode = #tpu.pipeline_mode<synchronous>, transform_indices = @transform_6, window_bounds = array<i64: 4, 1, 8>}, {pipeline_mode = #tpu.pipeline_mode<synchronous>, transform_indices = @transform_7, window_bounds = array<i64: 4, 1, 1>}, {pipeline_mode = #tpu.pipeline_mode<synchronous>, transform_indices = @transform_8, window_bounds = array<i64: 4, 8, 32>}, {pipeline_mode = #tpu.pipeline_mode<synchronous>, transform_indices = @transform_9, window_bounds = array<i64: 1, 32>}, {pipeline_mode = #tpu.pipeline_mode<synchronous>, transform_indices = @transform_10, window_bounds = array<i64: 1, 32>}, {pipeline_mode = #tpu.pipeline_mode<synchronous>, transform_indices = @transform_11, window_bounds = array<i64: 1, 32>}, {pipeline_mode = #tpu.pipeline_mode<synchronous>, transform_indices = @transform_12, window_bounds = array<i64: 32, 64>}, {pipeline_mode = #tpu.pipeline_mode<synchronous>, transform_indices = @transform_13, window_bounds = array<i64: 1, 64>}, {pipeline_mode = #tpu.pipeline_mode<synchronous>, transform_indices = @transform_14, window_bounds = array<i64: 64, 32>}, {pipeline_mode = #tpu.pipeline_mode<synchronous>, transform_indices = @transform_15, window_bounds = array<i64: 1, 32>}, {pipeline_mode = #tpu.pipeline_mode<synchronous>, transform_indices = @transform_16, window_bounds = array<i64: 1, 32>}, {pipeline_mode = #tpu.pipeline_mode<synchronous>, transform_indices = @transform_17, window_bounds = array<i64: 1, 32>}, {transform_indices = @transform_18, window_bounds = array<i64: 1, 8, 32>}]} {
    %c0 = arith.constant 0 : index
    %c0_0 = arith.constant 0 : index
    %c0_1 = arith.constant 0 : index
    %0 = vector.load %arg2[%c0, %c0_0, %c0_1] : memref<1x8x32xf32, #tpu.memory_space<vmem>>, vector<1x8x32xf32>
    %1 = vector.shape_cast %0 : vector<1x8x32xf32> to vector<8x32xf32>
    %c0_2 = arith.constant 0 : index
    %c0_3 = arith.constant 0 : index
    %c0_4 = arith.constant 0 : index
    %2 = vector.load %arg3[%c0_2, %c0_3, %c0_4] : memref<1x8x32xf32, #tpu.memory_space<vmem>>, vector<1x8x32xf32>
    %3 = vector.shape_cast %2 : vector<1x8x32xf32> to vector<8x32xf32>
    %c0_5 = arith.constant 0 : index
    %c0_6 = arith.constant 0 : index
    %c0_7 = arith.constant 0 : index
    %4 = vector.load %arg4[%c0_5, %c0_6, %c0_7] : memref<1x8x32xf32, #tpu.memory_space<vmem>>, vector<1x8x32xf32>
    %5 = vector.shape_cast %4 : vector<1x8x32xf32> to vector<8x32xf32>
    %c0_8 = arith.constant 0 : index
    %c0_9 = arith.constant 0 : index
    %c0_10 = arith.constant 0 : index
    %6 = vector.load %arg5[%c0_8, %c0_9, %c0_10] : memref<4x32x8xf32, #tpu.memory_space<vmem>>, vector<4x32x8xf32>
    %7 = arith.truncf %6 : vector<4x32x8xf32> to vector<4x32x8xbf16>
    %c0_11 = arith.constant 0 : index
    %c0_12 = arith.constant 0 : index
    %c0_13 = arith.constant 0 : index
    %8 = vector.load %arg7[%c0_11, %c0_12, %c0_13] : memref<4x32x8xf32, #tpu.memory_space<vmem>>, vector<4x32x8xf32>
    %9 = arith.truncf %8 : vector<4x32x8xf32> to vector<4x32x8xbf16>
    %10 = arith.truncf %1 : vector<8x32xf32> to vector<8x32xbf16>
    %11 = vector.shape_cast %10 : vector<8x32xbf16> to vector<1x8x32xbf16>
    %12 = vector.broadcast %11 : vector<1x8x32xbf16> to vector<4x8x32xbf16>
    %13 = arith.truncf %3 : vector<8x32xf32> to vector<8x32xbf16>
    %14 = vector.shape_cast %13 : vector<8x32xbf16> to vector<1x8x32xbf16>
    %15 = vector.broadcast %14 : vector<1x8x32xbf16> to vector<4x8x32xbf16>
    %16 = arith.truncf %5 : vector<8x32xf32> to vector<8x32xbf16>
    %17 = vector.shape_cast %16 : vector<8x32xbf16> to vector<1x8x32xbf16>
    %18 = vector.broadcast %17 : vector<1x8x32xbf16> to vector<4x8x32xbf16>
    "tpu.trace_start"() <{level = 10 : i32, message = "hsd,hdk->hsk"}> : () -> ()
    %cst = arith.constant dense<0.000000e+00> : vector<4x8x8xf32>
    %19 = tpu.matmul %12, %7, %cst {dimension_numbers = #tpu.dot_dimension_numbers<[2], [1], [1], [2], [0, 0, 0, 1, 1, 2], [0], [0]>} : vector<4x8x32xbf16>, vector<4x32x8xbf16>, vector<4x8x8xf32> -> vector<4x8x8xf32>
    "tpu.trace_stop"() : () -> ()
    %c0_14 = arith.constant 0 : index
    %c0_15 = arith.constant 0 : index
    %c0_16 = arith.constant 0 : index
    %20 = vector.load %arg6[%c0_14, %c0_15, %c0_16] : memref<4x1x8xf32, #tpu.memory_space<vmem>>, vector<4x1x8xf32>
    %21 = vector.broadcast %20 : vector<4x1x8xf32> to vector<4x8x8xf32>
    %22 = arith.addf %19, %21 : vector<4x8x8xf32>
    "tpu.trace_start"() <{level = 10 : i32, message = "hsd,hdk->hsk"}> : () -> ()
    %cst_17 = arith.constant dense<0.000000e+00> : vector<4x8x8xf32>
    %23 = tpu.matmul %15, %7, %cst_17 {dimension_numbers = #tpu.dot_dimension_numbers<[2], [1], [1], [2], [0, 0, 0, 1, 1, 2], [0], [0]>} : vector<4x8x32xbf16>, vector<4x32x8xbf16>, vector<4x8x8xf32> -> vector<4x8x8xf32>
    "tpu.trace_stop"() : () -> ()
    %c0_18 = arith.constant 0 : index
    %c0_19 = arith.constant 0 : index
    %c0_20 = arith.constant 0 : index
    %24 = vector.load %arg6[%c0_18, %c0_19, %c0_20] : memref<4x1x8xf32, #tpu.memory_space<vmem>>, vector<4x1x8xf32>
    %25 = vector.broadcast %24 : vector<4x1x8xf32> to vector<4x8x8xf32>
    %26 = arith.addf %23, %25 : vector<4x8x8xf32>
    "tpu.trace_start"() <{level = 10 : i32, message = "hsd,hdk->hsk"}> : () -> ()
    %cst_21 = arith.constant dense<0.000000e+00> : vector<4x8x8xf32>
    %27 = tpu.matmul %18, %9, %cst_21 {dimension_numbers = #tpu.dot_dimension_numbers<[2], [1], [1], [2], [0, 0, 0, 1, 1, 2], [0], [0]>} : vector<4x8x32xbf16>, vector<4x32x8xbf16>, vector<4x8x8xf32> -> vector<4x8x8xf32>
    "tpu.trace_stop"() : () -> ()
    %c0_22 = arith.constant 0 : index
    %c0_23 = arith.constant 0 : index
    %c0_24 = arith.constant 0 : index
    %28 = vector.load %arg8[%c0_22, %c0_23, %c0_24] : memref<4x1x8xf32, #tpu.memory_space<vmem>>, vector<4x1x8xf32>
    %29 = vector.broadcast %28 : vector<4x1x8xf32> to vector<4x8x8xf32>
    %30 = arith.addf %27, %29 : vector<4x8x8xf32>
    %31 = tpu.iota {dimensions = array<i32: 0>} : vector<8x8xi32>
    %32 = tpu.iota {dimensions = array<i32: 1>} : vector<8x8xi32>
    %c8_i32 = arith.constant 8 : i32
    %33 = arith.muli %arg1, %c8_i32 : i32
    %34 = vector.broadcast %33 : i32 to vector<8x8xi32>
    %35 = arith.addi %31, %34 : vector<8x8xi32>
    %c-1_i32 = arith.constant -1 : i32
    %36 = vector.broadcast %c-1_i32 : i32 to vector<8x8xi32>
    %37 = arith.addi %35, %36 : vector<8x8xi32>
    %38 = arith.cmpi sle, %32, %37 : vector<8x8xi32>
    %39 = arith.extui %38 : vector<8x8xi1> to vector<8x8xi32>
    %40 = arith.sitofp %39 : vector<8x8xi32> to vector<8x8xf32>
    %41 = arith.subi %32, %35 : vector<8x8xi32>
    %42 = math.absi %41 : vector<8x8xi32>
    %43 = arith.sitofp %42 : vector<8x8xi32> to vector<8x8xf32>
    %44 = arith.truncf %22 : vector<4x8x8xf32> to vector<4x8x8xbf16>
    %45 = arith.truncf %26 : vector<4x8x8xf32> to vector<4x8x8xbf16>
    "tpu.trace_start"() <{level = 10 : i32, message = "hqd,hkd->hqk"}> : () -> ()
    %cst_25 = arith.constant dense<0.000000e+00> : vector<4x8x8xf32>
    %46 = tpu.matmul %44, %45, %cst_25 {dimension_numbers = #tpu.dot_dimension_numbers<[2], [2], [1], [1], [0, 0, 0, 1, 1, 1], [0], [0]>} : vector<4x8x8xbf16>, vector<4x8x8xbf16>, vector<4x8x8xf32> -> vector<4x8x8xf32>
    "tpu.trace_stop"() : () -> ()
    %cst_26 = arith.constant 0.353553385 : f32
    %47 = vector.broadcast %cst_26 : f32 to vector<4x8x8xf32>
    %48 = arith.mulf %46, %47 : vector<4x8x8xf32>
    %cst_27 = arith.constant -1.000000e+32 : f32
    %49 = vector.shape_cast %38 : vector<8x8xi1> to vector<1x8x8xi1>
    %50 = vector.broadcast %49 : vector<1x8x8xi1> to vector<4x8x8xi1>
    %51 = vector.broadcast %cst_27 : f32 to vector<4x8x8xf32>
    %52 = arith.select %50, %48, %51 : vector<4x8x8xi1>, vector<4x8x8xf32>
    %cst_28 = arith.constant dense<0xFF800000> : vector<4x8xf32>
    %53 = vector.multi_reduction <maximumf>, %52, %cst_28 [2] : vector<4x8x8xf32> to vector<4x8xf32>
    %54 = vector.shape_cast %53 : vector<4x8xf32> to vector<4x8x1xf32>
    %55 = vector.broadcast %54 : vector<4x8x1xf32> to vector<4x8x8xf32>
    %56 = arith.subf %52, %55 : vector<4x8x8xf32>
    %57 = math.exp %56 : vector<4x8x8xf32>
    %cst_29 = arith.constant dense<0.000000e+00> : vector<4x8xf32>
    %58 = vector.multi_reduction <add>, %57, %cst_29 [2] : vector<4x8x8xf32> to vector<4x8xf32>
    %59 = vector.shape_cast %58 : vector<4x8xf32> to vector<4x8x1xf32>
    %60 = tpu.reciprocal %59 : vector<4x8x1xf32> -> vector<4x8x1xf32>
    %61 = vector.broadcast %60 : vector<4x8x1xf32> to vector<4x8x8xf32>
    %62 = arith.mulf %57, %61 : vector<4x8x8xf32>
    %63 = vector.shape_cast %40 : vector<8x8xf32> to vector<1x8x8xf32>
    %64 = vector.broadcast %63 : vector<1x8x8xf32> to vector<4x8x8xf32>
    %65 = arith.mulf %62, %64 : vector<4x8x8xf32>
    %66 = tpu.iota {dimensions = array<i32: 0>} : vector<8x8xi32>
    %67 = tpu.iota {dimensions = array<i32: 1>} : vector<8x8xi32>
    %68 = arith.cmpi sgt, %66, %67 : vector<8x8xi32>
    %69 = arith.extui %68 : vector<8x8xi1> to vector<8x8xi32>
    %70 = arith.sitofp %69 : vector<8x8xi32> to vector<8x8xf32>
    %71 = arith.truncf %70 : vector<8x8xf32> to vector<8x8xbf16>
    %72 = arith.truncf %65 : vector<4x8x8xf32> to vector<4x8x8xbf16>
    %73 = vector.shape_cast %71 : vector<8x8xbf16> to vector<1x8x8xbf16>
    %74 = vector.broadcast %73 : vector<1x8x8xbf16> to vector<4x8x8xbf16>
    "tpu.trace_start"() <{level = 10 : i32, message = "hqk,hkj->hqj"}> : () -> ()
    %cst_30 = arith.constant dense<0.000000e+00> : vector<4x8x8xf32>
    %75 = tpu.matmul %72, %74, %cst_30 {dimension_numbers = #tpu.dot_dimension_numbers<[2], [1], [1], [2], [0, 0, 0, 1, 1, 2], [0], [0]>} : vector<4x8x8xbf16>, vector<4x8x8xbf16>, vector<4x8x8xf32> -> vector<4x8x8xf32>
    "tpu.trace_stop"() : () -> ()
    %76 = vector.shape_cast %43 : vector<8x8xf32> to vector<1x8x8xf32>
    %77 = vector.broadcast %76 : vector<1x8x8xf32> to vector<4x8x8xf32>
    %78 = arith.mulf %75, %77 : vector<4x8x8xf32>
    %cst_31 = arith.constant 0.000000e+00 : f32
    %79 = vector.broadcast %cst_31 : f32 to vector<4x8x8xf32>
    %80 = arith.maximumf %78, %79 : vector<4x8x8xf32>
    %81 = math.sqrt %80 : vector<4x8x8xf32>
    %c0_32 = arith.constant 0 : index
    %c0_33 = arith.constant 0 : index
    %c0_34 = arith.constant 0 : index
    %82 = vector.load %arg9[%c0_32, %c0_33, %c0_34] : memref<4x1x1xf32, #tpu.memory_space<vmem>>, vector<4x1x1xf32>
    %cst_35 = arith.constant 0.000000e+00 : f32
    %83 = vector.broadcast %cst_35 : f32 to vector<4x1x1xf32>
    %84 = arith.maximumf %82, %83 : vector<4x1x1xf32>
    %85 = math.absf %82 : vector<4x1x1xf32>
    %cst_36 = arith.constant 0.000000e+00 : f32
    %86 = vector.broadcast %cst_36 : f32 to vector<4x1x1xf32>
    %87 = arith.subf %86, %85 : vector<4x1x1xf32>
    %88 = math.exp %87 : vector<4x1x1xf32>
    %89 = math.log1p %88 : vector<4x1x1xf32>
    %90 = arith.addf %84, %89 : vector<4x1x1xf32>
    %cst_37 = arith.constant 0.000000e+00 : f32
    %91 = vector.broadcast %cst_37 : f32 to vector<4x1x1xf32>
    %92 = arith.subf %91, %90 : vector<4x1x1xf32>
    %93 = vector.broadcast %92 : vector<4x1x1xf32> to vector<4x8x8xf32>
    %94 = arith.mulf %81, %93 : vector<4x8x8xf32>
    %95 = math.exp %94 : vector<4x8x8xf32>
    %cst_38 = arith.constant 9.99999974E-6 : f32
    %cst_39 = arith.constant 1.000000e+05 : f32
    %96 = vector.broadcast %cst_38 : f32 to vector<4x8x8xf32>
    %97 = arith.maximumf %96, %95 : vector<4x8x8xf32>
    %98 = vector.broadcast %cst_39 : f32 to vector<4x8x8xf32>
    %99 = arith.minimumf %98, %97 : vector<4x8x8xf32>
    %100 = arith.mulf %48, %99 : vector<4x8x8xf32>
    %cst_40 = arith.constant -1.000000e+32 : f32
    %101 = vector.shape_cast %38 : vector<8x8xi1> to vector<1x8x8xi1>
    %102 = vector.broadcast %101 : vector<1x8x8xi1> to vector<4x8x8xi1>
    %103 = vector.broadcast %cst_40 : f32 to vector<4x8x8xf32>
    %104 = arith.select %102, %100, %103 : vector<4x8x8xi1>, vector<4x8x8xf32>
    %cst_41 = arith.constant dense<0xFF800000> : vector<4x8xf32>
    %105 = vector.multi_reduction <maximumf>, %104, %cst_41 [2] : vector<4x8x8xf32> to vector<4x8xf32>
    %106 = vector.shape_cast %105 : vector<4x8xf32> to vector<4x8x1xf32>
    %107 = vector.broadcast %106 : vector<4x8x1xf32> to vector<4x8x8xf32>
    %108 = arith.subf %104, %107 : vector<4x8x8xf32>
    %109 = math.exp %108 : vector<4x8x8xf32>
    %cst_42 = arith.constant dense<0.000000e+00> : vector<4x8xf32>
    %110 = vector.multi_reduction <add>, %109, %cst_42 [2] : vector<4x8x8xf32> to vector<4x8xf32>
    %111 = vector.shape_cast %110 : vector<4x8xf32> to vector<4x8x1xf32>
    %112 = tpu.reciprocal %111 : vector<4x8x1xf32> -> vector<4x8x1xf32>
    %113 = vector.broadcast %112 : vector<4x8x1xf32> to vector<4x8x8xf32>
    %114 = arith.mulf %109, %113 : vector<4x8x8xf32>
    %c0_i32 = arith.constant 0 : i32
    %115 = vector.broadcast %c0_i32 : i32 to vector<8x8xi32>
    %116 = arith.cmpi eq, %35, %115 : vector<8x8xi32>
    %cst_43 = arith.constant 0.000000e+00 : f32
    %117 = vector.shape_cast %116 : vector<8x8xi1> to vector<1x8x8xi1>
    %118 = vector.broadcast %117 : vector<1x8x8xi1> to vector<4x8x8xi1>
    %119 = vector.broadcast %cst_43 : f32 to vector<4x8x8xf32>
    %120 = arith.select %118, %119, %114 : vector<4x8x8xi1>, vector<4x8x8xf32>
    %121 = arith.truncf %120 : vector<4x8x8xf32> to vector<4x8x8xbf16>
    %122 = arith.truncf %30 : vector<4x8x8xf32> to vector<4x8x8xbf16>
    "tpu.trace_start"() <{level = 10 : i32, message = "hqk,hkd->hqd"}> : () -> ()
    %cst_44 = arith.constant dense<0.000000e+00> : vector<4x8x8xf32>
    %123 = tpu.matmul %121, %122, %cst_44 {dimension_numbers = #tpu.dot_dimension_numbers<[2], [1], [1], [2], [0, 0, 0, 1, 1, 2], [0], [0]>} : vector<4x8x8xbf16>, vector<4x8x8xbf16>, vector<4x8x8xf32> -> vector<4x8x8xf32>
    "tpu.trace_stop"() : () -> ()
    %c0_45 = arith.constant 0 : index
    %c0_46 = arith.constant 0 : index
    %c0_47 = arith.constant 0 : index
    %124 = vector.load %arg10[%c0_45, %c0_46, %c0_47] : memref<4x8x32xf32, #tpu.memory_space<vmem>>, vector<4x8x32xf32>
    %125 = arith.truncf %124 : vector<4x8x32xf32> to vector<4x8x32xbf16>
    %126 = arith.truncf %123 : vector<4x8x8xf32> to vector<4x8x8xbf16>
    "tpu.trace_start"() <{level = 10 : i32, message = "hqd,hdm->hqm"}> : () -> ()
    %cst_48 = arith.constant dense<0.000000e+00> : vector<4x8x32xf32>
    %127 = tpu.matmul %126, %125, %cst_48 {dimension_numbers = #tpu.dot_dimension_numbers<[2], [1], [1], [2], [0, 0, 0, 1, 1, 2], [0], [0]>} : vector<4x8x8xbf16>, vector<4x8x32xbf16>, vector<4x8x32xf32> -> vector<4x8x32xf32>
    "tpu.trace_stop"() : () -> ()
    %cst_49 = arith.constant dense<0.000000e+00> : vector<8x32xf32>
    %128 = vector.multi_reduction <add>, %127, %cst_49 [0] : vector<4x8x32xf32> to vector<8x32xf32>
    %c0_50 = arith.constant 0 : index
    %c0_51 = arith.constant 0 : index
    %129 = vector.load %arg11[%c0_50, %c0_51] : memref<1x32xf32, #tpu.memory_space<vmem>>, vector<1x32xf32>
    %130 = vector.broadcast %129 : vector<1x32xf32> to vector<8x32xf32>
    %131 = arith.addf %128, %130 : vector<8x32xf32>
    %132 = arith.addf %1, %131 : vector<8x32xf32>
    %c0_52 = arith.constant 0 : index
    %c0_53 = arith.constant 0 : index
    %133 = vector.load %arg12[%c0_52, %c0_53] : memref<1x32xf32, #tpu.memory_space<vmem>>, vector<1x32xf32>
    %c0_54 = arith.constant 0 : index
    %c0_55 = arith.constant 0 : index
    %134 = vector.load %arg13[%c0_54, %c0_55] : memref<1x32xf32, #tpu.memory_space<vmem>>, vector<1x32xf32>
    %cst_56 = arith.constant dense<0.000000e+00> : vector<8xf32>
    %135 = vector.multi_reduction <add>, %132, %cst_56 [1] : vector<8x32xf32> to vector<8xf32>
    %136 = vector.shape_cast %135 : vector<8xf32> to vector<8x1xf32>
    %cst_57 = arith.constant 3.200000e+01 : f32
    %137 = vector.broadcast %cst_57 : f32 to vector<8x1xf32>
    %138 = arith.divf %136, %137 : vector<8x1xf32>
    %139 = vector.broadcast %138 : vector<8x1xf32> to vector<8x32xf32>
    %140 = arith.subf %132, %139 : vector<8x32xf32>
    %141 = arith.mulf %140, %140 : vector<8x32xf32>
    %cst_58 = arith.constant dense<0.000000e+00> : vector<8xf32>
    %142 = vector.multi_reduction <add>, %141, %cst_58 [1] : vector<8x32xf32> to vector<8xf32>
    %143 = vector.shape_cast %142 : vector<8xf32> to vector<8x1xf32>
    %cst_59 = arith.constant 3.200000e+01 : f32
    %144 = vector.broadcast %cst_59 : f32 to vector<8x1xf32>
    %145 = arith.divf %143, %144 : vector<8x1xf32>
    %146 = vector.broadcast %138 : vector<8x1xf32> to vector<8x32xf32>
    %147 = arith.subf %132, %146 : vector<8x32xf32>
    %cst_60 = arith.constant 9.99999974E-6 : f32
    %148 = vector.broadcast %cst_60 : f32 to vector<8x1xf32>
    %149 = arith.addf %145, %148 : vector<8x1xf32>
    %150 = math.rsqrt %149 : vector<8x1xf32>
    %151 = vector.broadcast %150 : vector<8x1xf32> to vector<8x32xf32>
    %152 = arith.mulf %147, %151 : vector<8x32xf32>
    %153 = vector.broadcast %133 : vector<1x32xf32> to vector<8x32xf32>
    %154 = arith.mulf %152, %153 : vector<8x32xf32>
    %155 = vector.broadcast %134 : vector<1x32xf32> to vector<8x32xf32>
    %156 = arith.addf %154, %155 : vector<8x32xf32>
    %157 = arith.truncf %156 : vector<8x32xf32> to vector<8x32xbf16>
    %c0_61 = arith.constant 0 : index
    %c0_62 = arith.constant 0 : index
    %158 = vector.load %arg14[%c0_61, %c0_62] : memref<32x64xf32, #tpu.memory_space<vmem>>, vector<32x64xf32>
    %159 = arith.truncf %158 : vector<32x64xf32> to vector<32x64xbf16>
    %cst_63 = arith.constant dense<0.000000e+00> : vector<8x64xf32>
    %160 = tpu.matmul %157, %159, %cst_63 {dimension_numbers = #tpu.dot_dimension_numbers<[1], [0], [0], [1], [0, 0, 1, 1], [], []>} : vector<8x32xbf16>, vector<32x64xbf16>, vector<8x64xf32> -> vector<8x64xf32>
    %c0_64 = arith.constant 0 : index
    %c0_65 = arith.constant 0 : index
    %161 = vector.load %arg15[%c0_64, %c0_65] : memref<1x64xf32, #tpu.memory_space<vmem>>, vector<1x64xf32>
    %162 = vector.broadcast %161 : vector<1x64xf32> to vector<8x64xf32>
    %163 = arith.addf %160, %162 : vector<8x64xf32>
    %cst_66 = arith.constant 0.000000e+00 : f32
    %164 = vector.broadcast %cst_66 : f32 to vector<8x64xf32>
    %165 = arith.maximumf %163, %164 : vector<8x64xf32>
    %166 = arith.truncf %165 : vector<8x64xf32> to vector<8x64xbf16>
    %c0_67 = arith.constant 0 : index
    %c0_68 = arith.constant 0 : index
    %167 = vector.load %arg16[%c0_67, %c0_68] : memref<64x32xf32, #tpu.memory_space<vmem>>, vector<64x32xf32>
    %168 = arith.truncf %167 : vector<64x32xf32> to vector<64x32xbf16>
    %cst_69 = arith.constant dense<0.000000e+00> : vector<8x32xf32>
    %169 = tpu.matmul %166, %168, %cst_69 {dimension_numbers = #tpu.dot_dimension_numbers<[1], [0], [0], [1], [0, 0, 1, 1], [], []>} : vector<8x64xbf16>, vector<64x32xbf16>, vector<8x32xf32> -> vector<8x32xf32>
    %c0_70 = arith.constant 0 : index
    %c0_71 = arith.constant 0 : index
    %170 = vector.load %arg17[%c0_70, %c0_71] : memref<1x32xf32, #tpu.memory_space<vmem>>, vector<1x32xf32>
    %171 = vector.broadcast %170 : vector<1x32xf32> to vector<8x32xf32>
    %172 = arith.addf %169, %171 : vector<8x32xf32>
    %173 = arith.addf %156, %172 : vector<8x32xf32>
    %c0_72 = arith.constant 0 : index
    %c0_73 = arith.constant 0 : index
    %174 = vector.load %arg18[%c0_72, %c0_73] : memref<1x32xf32, #tpu.memory_space<vmem>>, vector<1x32xf32>
    %c0_74 = arith.constant 0 : index
    %c0_75 = arith.constant 0 : index
    %175 = vector.load %arg19[%c0_74, %c0_75] : memref<1x32xf32, #tpu.memory_space<vmem>>, vector<1x32xf32>
    %cst_76 = arith.constant dense<0.000000e+00> : vector<8xf32>
    %176 = vector.multi_reduction <add>, %173, %cst_76 [1] : vector<8x32xf32> to vector<8xf32>
    %177 = vector.shape_cast %176 : vector<8xf32> to vector<8x1xf32>
    %cst_77 = arith.constant 3.200000e+01 : f32
    %178 = vector.broadcast %cst_77 : f32 to vector<8x1xf32>
    %179 = arith.divf %177, %178 : vector<8x1xf32>
    %180 = vector.broadcast %179 : vector<8x1xf32> to vector<8x32xf32>
    %181 = arith.subf %173, %180 : vector<8x32xf32>
    %182 = arith.mulf %181, %181 : vector<8x32xf32>
    %cst_78 = arith.constant dense<0.000000e+00> : vector<8xf32>
    %183 = vector.multi_reduction <add>, %182, %cst_78 [1] : vector<8x32xf32> to vector<8xf32>
    %184 = vector.shape_cast %183 : vector<8xf32> to vector<8x1xf32>
    %cst_79 = arith.constant 3.200000e+01 : f32
    %185 = vector.broadcast %cst_79 : f32 to vector<8x1xf32>
    %186 = arith.divf %184, %185 : vector<8x1xf32>
    %187 = vector.broadcast %179 : vector<8x1xf32> to vector<8x32xf32>
    %188 = arith.subf %173, %187 : vector<8x32xf32>
    %cst_80 = arith.constant 9.99999974E-6 : f32
    %189 = vector.broadcast %cst_80 : f32 to vector<8x1xf32>
    %190 = arith.addf %186, %189 : vector<8x1xf32>
    %191 = math.rsqrt %190 : vector<8x1xf32>
    %192 = vector.broadcast %191 : vector<8x1xf32> to vector<8x32xf32>
    %193 = arith.mulf %188, %192 : vector<8x32xf32>
    %194 = vector.broadcast %174 : vector<1x32xf32> to vector<8x32xf32>
    %195 = arith.mulf %193, %194 : vector<8x32xf32>
    %196 = vector.broadcast %175 : vector<1x32xf32> to vector<8x32xf32>
    %197 = arith.addf %195, %196 : vector<8x32xf32>
    %c0_81 = arith.constant 0 : index
    %c0_82 = arith.constant 0 : index
    %c0_83 = arith.constant 0 : index
    %198 = vector.load %arg20[%c0_81, %c0_82, %c0_83] : memref<1x8x32xf32, #tpu.memory_space<vmem>>, vector<1x8x32xf32>
    %199 = vector.shape_cast %198 : vector<1x8x32xf32> to vector<8x32xf32>
    %200 = vector.shape_cast %197 : vector<8x32xf32> to vector<1x8x32xf32>
    tpu.vector_store %arg20[%c0_81, %c0_82, %c0_83], %200 {strides = array<i32>} : memref<1x8x32xf32, #tpu.memory_space<vmem>>, vector<1x8x32xf32>,
    return
  }
  func.func @transform_0(%arg0: i32, %arg1: i32) -> (i32, i32, i32) {
    %c0_i32 = arith.constant 0 : i32
    %c0_i32_0 = arith.constant 0 : i32
    return %arg0, %arg1, %c0_i32 : i32, i32, i32
  }
  func.func @transform_1(%arg0: i32, %arg1: i32) -> (i32, i32, i32) {
    %c0_i32 = arith.constant 0 : i32
    %c0_i32_0 = arith.constant 0 : i32
    %c0_i32_1 = arith.constant 0 : i32
    return %arg0, %c0_i32, %c0_i32_0 : i32, i32, i32
  }
  func.func @transform_2(%arg0: i32, %arg1: i32) -> (i32, i32, i32) {
    %c0_i32 = arith.constant 0 : i32
    %c0_i32_0 = arith.constant 0 : i32
    %c0_i32_1 = arith.constant 0 : i32
    return %arg0, %c0_i32, %c0_i32_0 : i32, i32, i32
  }
  func.func @transform_3(%arg0: i32, %arg1: i32) -> (i32, i32, i32) {
    %c0_i32 = arith.constant 0 : i32
    %c0_i32_0 = arith.constant 0 : i32
    %c0_i32_1 = arith.constant 0 : i32
    %c0_i32_2 = arith.constant 0 : i32
    return %c0_i32, %c0_i32_0, %c0_i32_1 : i32, i32, i32
  }
  func.func @transform_4(%arg0: i32, %arg1: i32) -> (i32, i32, i32) {
    %c0_i32 = arith.constant 0 : i32
    %c0_i32_0 = arith.constant 0 : i32
    %c0_i32_1 = arith.constant 0 : i32
    %c0_i32_2 = arith.constant 0 : i32
    return %c0_i32, %c0_i32_0, %c0_i32_1 : i32, i32, i32
  }
  func.func @transform_5(%arg0: i32, %arg1: i32) -> (i32, i32, i32) {
    %c0_i32 = arith.constant 0 : i32
    %c0_i32_0 = arith.constant 0 : i32
    %c0_i32_1 = arith.constant 0 : i32
    %c0_i32_2 = arith.constant 0 : i32
    return %c0_i32, %c0_i32_0, %c0_i32_1 : i32, i32, i32
  }
  func.func @transform_6(%arg0: i32, %arg1: i32) -> (i32, i32, i32) {
    %c0_i32 = arith.constant 0 : i32
    %c0_i32_0 = arith.constant 0 : i32
    %c0_i32_1 = arith.constant 0 : i32
    %c0_i32_2 = arith.constant 0 : i32
    return %c0_i32, %c0_i32_0, %c0_i32_1 : i32, i32, i32
  }
  func.func @transform_7(%arg0: i32, %arg1: i32) -> (i32, i32, i32) {
    %c0_i32 = arith.constant 0 : i32
    %c0_i32_0 = arith.constant 0 : i32
    %c0_i32_1 = arith.constant 0 : i32
    %c0_i32_2 = arith.constant 0 : i32
    return %c0_i32, %c0_i32_0, %c0_i32_1 : i32, i32, i32
  }
  func.func @transform_8(%arg0: i32, %arg1: i32) -> (i32, i32, i32) {
    %c0_i32 = arith.constant 0 : i32
    %c0_i32_0 = arith.constant 0 : i32
    %c0_i32_1 = arith.constant 0 : i32
    %c0_i32_2 = arith.constant 0 : i32
    return %c0_i32, %c0_i32_0, %c0_i32_1 : i32, i32, i32
  }
  func.func @transform_9(%arg0: i32, %arg1: i32) -> (i32, i32) {
    %c0_i32 = arith.constant 0 : i32
    %c0_i32_0 = arith.constant 0 : i32
    %c0_i32_1 = arith.constant 0 : i32
    return %c0_i32, %c0_i32_0 : i32, i32
  }
  func.func @transform_10(%arg0: i32, %arg1: i32) -> (i32, i32) {
    %c0_i32 = arith.constant 0 : i32
    %c0_i32_0 = arith.constant 0 : i32
    %c0_i32_1 = arith.constant 0 : i32
    return %c0_i32, %c0_i32_0 : i32, i32
  }
  func.func @transform_11(%arg0: i32, %arg1: i32) -> (i32, i32) {
    %c0_i32 = arith.constant 0 : i32
    %c0_i32_0 = arith.constant 0 : i32
    %c0_i32_1 = arith.constant 0 : i32
    return %c0_i32, %c0_i32_0 : i32, i32
  }
  func.func @transform_12(%arg0: i32, %arg1: i32) -> (i32, i32) {
    %c0_i32 = arith.constant 0 : i32
    %c0_i32_0 = arith.constant 0 : i32
    %c0_i32_1 = arith.constant 0 : i32
    return %c0_i32, %c0_i32_0 : i32, i32
  }
  func.func @transform_13(%arg0: i32, %arg1: i32) -> (i32, i32) {
    %c0_i32 = arith.constant 0 : i32
    %c0_i32_0 = arith.constant 0 : i32
    %c0_i32_1 = arith.constant 0 : i32
    return %c0_i32, %c0_i32_0 : i32, i32
  }
  func.func @transform_14(%arg0: i32, %arg1: i32) -> (i32, i32) {
    %c0_i32 = arith.constant 0 : i32
    %c0_i32_0 = arith.constant 0 : i32
    %c0_i32_1 = arith.constant 0 : i32
    return %c0_i32, %c0_i32_0 : i32, i32
  }
  func.func @transform_15(%arg0: i32, %arg1: i32) -> (i32, i32) {
    %c0_i32 = arith.constant 0 : i32
    %c0_i32_0 = arith.constant 0 : i32
    %c0_i32_1 = arith.constant 0 : i32
    return %c0_i32, %c0_i32_0 : i32, i32
  }
  func.func @transform_16(%arg0: i32, %arg1: i32) -> (i32, i32) {
    %c0_i32 = arith.constant 0 : i32
    %c0_i32_0 = arith.constant 0 : i32
    %c0_i32_1 = arith.constant 0 : i32
    return %c0_i32, %c0_i32_0 : i32, i32
  }
  func.func @transform_17(%arg0: i32, %arg1: i32) -> (i32, i32) {
    %c0_i32 = arith.constant 0 : i32
    %c0_i32_0 = arith.constant 0 : i32
    %c0_i32_1 = arith.constant 0 : i32
    return %c0_i32, %c0_i32_0 : i32, i32
  }
  func.func @transform_18(%arg0: i32, %arg1: i32) -> (i32, i32, i32) {
    %c0_i32 = arith.constant 0 : i32
    %c0_i32_0 = arith.constant 0 : i32
    return %arg0, %arg1, %c0_i32 : i32, i32, i32
  }
}

</mosaic_0001>

<llo_original>
// kernel: tpu_custom_call.1
$region0: #{tpu_custom_call.1}
  #allocation0 [shape = 'u32[]', space=smem, size = 0x4, offset = 0x4, fixed_abs, tag = 'smem constant byte address 0x4 - core index']
  #allocation1 [shape = 'u32[72,128]{1,0:T(1,128)}', space=vmem, size = 0x9000, scoped, tag = 'internal scratch']
  %s0 = inlined_call_operand.vmem [shape: f32[2,8,32], index: 0, kind: input, shape index: {}]
  %s1 = inlined_call_operand.vmem [shape: f32[2,8,32], index: 1, kind: input, shape index: {}]
  %s2 = inlined_call_operand.vmem [shape: f32[2,8,32], index: 2, kind: input, shape index: {}]
  %s3 = inlined_call_operand.vmem [shape: f32[4,32,8], index: 3, kind: input, shape index: {}]
  %s4 = inlined_call_operand.vmem [shape: f32[4,1,8], index: 4, kind: input, shape index: {}]
  %s5 = inlined_call_operand.vmem [shape: f32[4,32,8], index: 5, kind: input, shape index: {}]
  %s6 = inlined_call_operand.vmem [shape: f32[4,1,8], index: 6, kind: input, shape index: {}]
  %s7 = inlined_call_operand.vmem [shape: f32[4,1,1], index: 7, kind: input, shape index: {}]
  %s8 = inlined_call_operand.vmem [shape: f32[4,8,32], index: 8, kind: input, shape index: {}]
  %s9 = inlined_call_operand.vmem [shape: f32[1,32], index: 9, kind: input, shape index: {}]
  %s10 = inlined_call_operand.vmem [shape: f32[1,32], index: 10, kind: input, shape index: {}]
  %s11 = inlined_call_operand.vmem [shape: f32[1,32], index: 11, kind: input, shape index: {}]
  %s12 = inlined_call_operand.vmem [shape: f32[32,64], index: 12, kind: input, shape index: {}]
  %s13 = inlined_call_operand.vmem [shape: f32[1,64], index: 13, kind: input, shape index: {}]
  %s14 = inlined_call_operand.vmem [shape: f32[64,32], index: 14, kind: input, shape index: {}]
  %s15 = inlined_call_operand.vmem [shape: f32[1,32], index: 15, kind: input, shape index: {}]
  %s16 = inlined_call_operand.vmem [shape: f32[1,32], index: 16, kind: input, shape index: {}]
  %s17 = inlined_call_operand.vmem [shape: f32[1,32], index: 17, kind: input, shape index: {}]
  %s18 = inlined_call_operand.hbm [shape: f32[2,8,32], index: 18, kind: output, shape index: {}]
  %s19 = sld [smem:[#allocation0]]
  $region105: #{tpu_custom_call.1} parent=0
    _
  %s21 = ssub.s32 1, %s19
  %s22 = scalar_select 0, %s21, %s19
  $region1: #{tpu_custom_call.1} parent=0
    #allocation2 [shape = 'u8[8192]{0}', space=vmem, size = 0x2000, scoped, tag = 'output window, operand 0']
    #allocation3 [shape = 's32[2]{0}', space=sflag, size = 0x8, scoped, tag = 'scoped memory for tpu_custom_call.1']
    %23 = vsyncpa [#allocation3], 0
    %s24 = scalar_lea.sflag [#allocation3], 1
    %25 = vsyncpa %s24, 0
    loop: start=0, step=1, limit=4
    $region2: #{tpu_custom_call.1} parent=1 // loop_pre_header
      _
    $region3: #{tpu_custom_call.1} parent=1 // loop_header
      %s27 = sphi 0, %s31
      %p28 = scmp.ge.s32.totalorder %s27, 4
      %s34 = sphi 0, %s46
      %s35 = sphi 0, %s42
      %s36 = sphi 0, %s34
      %s37 = sphi 0, %s35
      %s38 = sphi 0, %s36
      %s39 = sphi 0, %s37
      %s51 = sphi 0, %s53
      %s54 = sphi 0, %s51
      %s55 = sphi 0, %s54
      %s71 = sphi 0, %s55
      %s77 = sphi 0, %s79
      %s80 = sphi 0, %s77
      %s81 = sphi 0, %s80
      %s97 = sphi 0, %s81
      %s103 = sphi 0, %s105
      %s106 = sphi 0, %s103
      %s107 = sphi 0, %s106
      %s123 = sphi 0, %s107
      %s127 = sphi 0, %s127
      %s129 = sphi 0, %s127
      %s130 = sphi 0, %s129
      %s144 = sphi 0, %s130
      %s148 = sphi 0, %s148
      %s150 = sphi 0, %s148
      %s151 = sphi 0, %s150
      %s165 = sphi 0, %s151
      %s169 = sphi 0, %s169
      %s171 = sphi 0, %s169
      %s172 = sphi 0, %s171
      %s186 = sphi 0, %s172
      %s190 = sphi 0, %s190
      %s192 = sphi 0, %s190
      %s193 = sphi 0, %s192
      %s207 = sphi 0, %s193
      %s211 = sphi 0, %s211
      %s213 = sphi 0, %s211
      %s214 = sphi 0, %s213
      %s228 = sphi 0, %s214
      %s232 = sphi 0, %s232
      %s234 = sphi 0, %s232
      %s235 = sphi 0, %s234
      %s249 = sphi 0, %s235
      %s253 = sphi 0, %s253
      %s255 = sphi 0, %s253
      %s256 = sphi 0, %s255
      %s270 = sphi 0, %s256
      %s274 = sphi 0, %s274
      %s276 = sphi 0, %s274
      %s277 = sphi 0, %s276
      %s291 = sphi 0, %s277
      %s295 = sphi 0, %s295
      %s297 = sphi 0, %s295
      %s298 = sphi 0, %s297
      %s312 = sphi 0, %s298
      %s316 = sphi 0, %s316
      %s318 = sphi 0, %s316
      %s319 = sphi 0, %s318
      %s333 = sphi 0, %s319
      %s337 = sphi 0, %s337
      %s339 = sphi 0, %s337
      %s340 = sphi 0, %s339
      %s354 = sphi 0, %s340
      %s358 = sphi 0, %s358
      %s360 = sphi 0, %s358
      %s361 = sphi 0, %s360
      %s375 = sphi 0, %s361
      %s379 = sphi 0, %s379
      %s381 = sphi 0, %s379
      %s382 = sphi 0, %s381
      %s396 = sphi 0, %s382
      %s400 = sphi 0, %s400
      %s402 = sphi 0, %s400
      %s403 = sphi 0, %s402
      %s417 = sphi 0, %s403
      %s421 = sphi 0, %s421
      %s423 = sphi 0, %s421
      %s424 = sphi 0, %s423
      %s438 = sphi 0, %s424
      %s446 = sphi 0, %s448
      %s449 = sphi 0, %s446
      %s450 = sphi 0, %s449
      %s466 = sphi 0, %s450
    $region4: #{tpu_custom_call.1} parent=1 // loop_header_branch
      %30 = sbr.rel (%p28) target = $region8
    $region5: #{tpu_custom_call.1} parent=1 // loop_body
      %s32 = ssub.s32 %s27, 1
      %s33 = ssub.s32 %s27, 2
      %s40 = sadd.s32 1, %s35
      %p41 = scmp.ge.s32.totalorder %s40, 1
      %s42 = scalar_select %p41, 0, %s40
      %s43 = sadd.s32 1, %s34
      %s44 = scalar_select %p41, %s43, %s34
      %p45 = scmp.ge.s32.totalorder %s44, 2
      %s46 = scalar_select %p45, 0, %s44
      %s47 = ssub.s32 %s34, %s46
      %s48 = ssub.s32 %s35, %s42
      %s49 = sor.u32 %s47, %s48
      %p50 = scmp.eq.s32.totalorder %s49, 0
      %s52 = sadd.s32 %s51, 1
      %s53 = scalar_select %p50, %s51, %s52
      %p56 = pneg %p50
      %p57 = scmp.eq.s32.totalorder %s27, 1
      %p58 = por %p56, %p57
      %p59 = scmp.ne.s32.totalorder %s51, %s54
      %p60 = scmp.eq.s32.totalorder %s27, 0
      %p61 = por %p59, %p60
      %p62 = scmp.ne.s32.totalorder %s51, %s54
      %p63 = scmp.eq.s32.totalorder %s32, 1
      %p64 = por %p62, %p63
      %p65 = scmp.ne.s32.totalorder %s54, %s55
      %p66 = scmp.eq.s32.totalorder %s32, 0
      %p67 = por %p65, %p66
      %p68 = scmp.ne.s32.totalorder %s54, %s55
      %p69 = scmp.eq.s32.totalorder %s33, 1
      %p70 = por %p68, %p69
      %p72 = scmp.ne.s32.totalorder %s55, %s71
      %p73 = scmp.eq.s32.totalorder %s33, 0
      %p74 = por %p72, %p73
      %s75 = ssub.s32 %s34, %s46
      %p76 = scmp.eq.s32.totalorder %s75, 0
      %s78 = sadd.s32 %s77, 1
      %s79 = scalar_select %p76, %s77, %s78
      %p82 = pneg %p76
      %p83 = scmp.eq.s32.totalorder %s27, 1
      %p84 = por %p82, %p83
      %p85 = scmp.ne.s32.totalorder %s77, %s80
      %p86 = scmp.eq.s32.totalorder %s27, 0
      %p87 = por %p85, %p86
      %p88 = scmp.ne.s32.totalorder %s77, %s80
      %p89 = scmp.eq.s32.totalorder %s32, 1
      %p90 = por %p88, %p89
      %p91 = scmp.ne.s32.totalorder %s80, %s81
      %p92 = scmp.eq.s32.totalorder %s32, 0
      %p93 = por %p91, %p92
      %p94 = scmp.ne.s32.totalorder %s80, %s81
      %p95 = scmp.eq.s32.totalorder %s33, 1
      %p96 = por %p94, %p95
      %p98 = scmp.ne.s32.totalorder %s81, %s97
      %p99 = scmp.eq.s32.totalorder %s33, 0
      %p100 = por %p98, %p99
      %s101 = ssub.s32 %s34, %s46
      %p102 = scmp.eq.s32.totalorder %s101, 0
      %s104 = sadd.s32 %s103, 1
      %s105 = scalar_select %p102, %s103, %s104
      %p108 = pneg %p102
      %p109 = scmp.eq.s32.totalorder %s27, 1
      %p110 = por %p108, %p109
      %p111 = scmp.ne.s32.totalorder %s103, %s106
      %p112 = scmp.eq.s32.totalorder %s27, 0
      %p113 = por %p111, %p112
      %p114 = scmp.ne.s32.totalorder %s103, %s106
      %p115 = scmp.eq.s32.totalorder %s32, 1
      %p116 = por %p114, %p115
      %p117 = scmp.ne.s32.totalorder %s106, %s107
      %p118 = scmp.eq.s32.totalorder %s32, 0
      %p119 = por %p117, %p118
      %p120 = scmp.ne.s32.totalorder %s106, %s107
      %p121 = scmp.eq.s32.totalorder %s33, 1
      %p122 = por %p120, %p121
      %p124 = scmp.ne.s32.totalorder %s107, %s123
      %p125 = scmp.eq.s32.totalorder %s33, 0
      %p126 = por %p124, %p125
      %s128 = sadd.s32 %s127, 1
      %p131 = scmp.eq.s32.totalorder %s27, 1
      %p132 = scmp.ne.s32.totalorder %s127, %s129
      %p133 = scmp.eq.s32.totalorder %s27, 0
      %p134 = por %p132, %p133
      %p135 = scmp.ne.s32.totalorder %s127, %s129
      %p136 = scmp.eq.s32.totalorder %s32, 1
      %p137 = por %p135, %p136
      %p138 = scmp.ne.s32.totalorder %s129, %s130
      %p139 = scmp.eq.s32.totalorder %s32, 0
      %p140 = por %p138, %p139
      %p141 = scmp.ne.s32.totalorder %s129, %s130
      %p142 = scmp.eq.s32.totalorder %s33, 1
      %p143 = por %p141, %p142
      %p145 = scmp.ne.s32.totalorder %s130, %s144
      %p146 = scmp.eq.s32.totalorder %s33, 0
      %p147 = por %p145, %p146
      %s149 = sadd.s32 %s148, 1
      %p152 = scmp.eq.s32.totalorder %s27, 1
      %p153 = scmp.ne.s32.totalorder %s148, %s150
      %p154 = scmp.eq.s32.totalorder %s27, 0
      %p155 = por %p153, %p154
      %p156 = scmp.ne.s32.totalorder %s148, %s150
      %p157 = scmp.eq.s32.totalorder %s32, 1
      %p158 = por %p156, %p157
      %p159 = scmp.ne.s32.totalorder %s150, %s151
      %p160 = scmp.eq.s32.totalorder %s32, 0
      %p161 = por %p159, %p160
      %p162 = scmp.ne.s32.totalorder %s150, %s151
      %p163 = scmp.eq.s32.totalorder %s33, 1
      %p164 = por %p162, %p163
      %p166 = scmp.ne.s32.totalorder %s151, %s165
      %p167 = scmp.eq.s32.totalorder %s33, 0
      %p168 = por %p166, %p167
      %s170 = sadd.s32 %s169, 1
      %p173 = scmp.eq.s32.totalorder %s27, 1
      %p174 = scmp.ne.s32.totalorder %s169, %s171
      %p175 = scmp.eq.s32.totalorder %s27, 0
      %p176 = por %p174, %p175
      %p177 = scmp.ne.s32.totalorder %s169, %s171
      %p178 = scmp.eq.s32.totalorder %s32, 1
      %p179 = por %p177, %p178
      %p180 = scmp.ne.s32.totalorder %s171, %s172
      %p181 = scmp.eq.s32.totalorder %s32, 0
      %p182 = por %p180, %p181
      %p183 = scmp.ne.s32.totalorder %s171, %s172
      %p184 = scmp.eq.s32.totalorder %s33, 1
      %p185 = por %p183, %p184
      %p187 = scmp.ne.s32.totalorder %s172, %s186
      %p188 = scmp.eq.s32.totalorder %s33, 0
      %p189 = por %p187, %p188
      %s191 = sadd.s32 %s190, 1
      %p194 = scmp.eq.s32.totalorder %s27, 1
      %p195 = scmp.ne.s32.totalorder %s190, %s192
      %p196 = scmp.eq.s32.totalorder %s27, 0
      %p197 = por %p195, %p196
      %p198 = scmp.ne.s32.totalorder %s190, %s192
      %p199 = scmp.eq.s32.totalorder %s32, 1
      %p200 = por %p198, %p199
      %p201 = scmp.ne.s32.totalorder %s192, %s193
      %p202 = scmp.eq.s32.totalorder %s32, 0
      %p203 = por %p201, %p202
      %p204 = scmp.ne.s32.totalorder %s192, %s193
      %p205 = scmp.eq.s32.totalorder %s33, 1
      %p206 = por %p204, %p205
      %p208 = scmp.ne.s32.totalorder %s193, %s207
      %p209 = scmp.eq.s32.totalorder %s33, 0
      %p210 = por %p208, %p209
      %s212 = sadd.s32 %s211, 1
      %p215 = scmp.eq.s32.totalorder %s27, 1
      %p216 = scmp.ne.s32.totalorder %s211, %s213
      %p217 = scmp.eq.s32.totalorder %s27, 0
      %p218 = por %p216, %p217
      %p219 = scmp.ne.s32.totalorder %s211, %s213
      %p220 = scmp.eq.s32.totalorder %s32, 1
      %p221 = por %p219, %p220
      %p222 = scmp.ne.s32.totalorder %s213, %s214
      %p223 = scmp.eq.s32.totalorder %s32, 0
      %p224 = por %p222, %p223
      %p225 = scmp.ne.s32.totalorder %s213, %s214
      %p226 = scmp.eq.s32.totalorder %s33, 1
      %p227 = por %p225, %p226
      %p229 = scmp.ne.s32.totalorder %s214, %s228
      %p230 = scmp.eq.s32.totalorder %s33, 0
      %p231 = por %p229, %p230
      %s233 = sadd.s32 %s232, 1
      %p236 = scmp.eq.s32.totalorder %s27, 1
      %p237 = scmp.ne.s32.totalorder %s232, %s234
      %p238 = scmp.eq.s32.totalorder %s27, 0
      %p239 = por %p237, %p238
      %p240 = scmp.ne.s32.totalorder %s232, %s234
      %p241 = scmp.eq.s32.totalorder %s32, 1
      %p242 = por %p240, %p241
      %p243 = scmp.ne.s32.totalorder %s234, %s235
      %p244 = scmp.eq.s32.totalorder %s32, 0
      %p245 = por %p243, %p244
      %p246 = scmp.ne.s32.totalorder %s234, %s235
      %p247 = scmp.eq.s32.totalorder %s33, 1
      %p248 = por %p246, %p247
      %p250 = scmp.ne.s32.totalorder %s235, %s249
      %p251 = scmp.eq.s32.totalorder %s33, 0
      %p252 = por %p250, %p251
      %s254 = sadd.s32 %s253, 1
      %p257 = scmp.eq.s32.totalorder %s27, 1
      %p258 = scmp.ne.s32.totalorder %s253, %s255
      %p259 = scmp.eq.s32.totalorder %s27, 0
      %p260 = por %p258, %p259
      %p261 = scmp.ne.s32.totalorder %s253, %s255
      %p262 = scmp.eq.s32.totalorder %s32, 1
      %p263 = por %p261, %p262
      %p264 = scmp.ne.s32.totalorder %s255, %s256
      %p265 = scmp.eq.s32.totalorder %s32, 0
      %p266 = por %p264, %p265
      %p267 = scmp.ne.s32.totalorder %s255, %s256
      %p268 = scmp.eq.s32.totalorder %s33, 1
      %p269 = por %p267, %p268
      %p271 = scmp.ne.s32.totalorder %s256, %s270
      %p272 = scmp.eq.s32.totalorder %s33, 0
      %p273 = por %p271, %p272
      %s275 = sadd.s32 %s274, 1
      %p278 = scmp.eq.s32.totalorder %s27, 1
      %p279 = scmp.ne.s32.totalorder %s274, %s276
      %p280 = scmp.eq.s32.totalorder %s27, 0
      %p281 = por %p279, %p280
      %p282 = scmp.ne.s32.totalorder %s274, %s276
      %p283 = scmp.eq.s32.totalorder %s32, 1
      %p284 = por %p282, %p283
      %p285 = scmp.ne.s32.totalorder %s276, %s277
      %p286 = scmp.eq.s32.totalorder %s32, 0
      %p287 = por %p285, %p286
      %p288 = scmp.ne.s32.totalorder %s276, %s277
      %p289 = scmp.eq.s32.totalorder %s33, 1
      %p290 = por %p288, %p289
      %p292 = scmp.ne.s32.totalorder %s277, %s291
      %p293 = scmp.eq.s32.totalorder %s33, 0
      %p294 = por %p292, %p293
      %s296 = sadd.s32 %s295, 1
      %p299 = scmp.eq.s32.totalorder %s27, 1
      %p300 = scmp.ne.s32.totalorder %s295, %s297
      %p301 = scmp.eq.s32.totalorder %s27, 0
      %p302 = por %p300, %p301
      %p303 = scmp.ne.s32.totalorder %s295, %s297
      %p304 = scmp.eq.s32.totalorder %s32, 1
      %p305 = por %p303, %p304
      %p306 = scmp.ne.s32.totalorder %s297, %s298
      %p307 = scmp.eq.s32.totalorder %s32, 0
      %p308 = por %p306, %p307
      %p309 = scmp.ne.s32.totalorder %s297, %s298
      %p310 = scmp.eq.s32.totalorder %s33, 1
      %p311 = por %p309, %p310
      %p313 = scmp.ne.s32.totalorder %s298, %s312
      %p314 = scmp.eq.s32.totalorder %s33, 0
      %p315 = por %p313, %p314
      %s317 = sadd.s32 %s316, 1
      %p320 = scmp.eq.s32.totalorder %s27, 1
      %p321 = scmp.ne.s32.totalorder %s316, %s318
      %p322 = scmp.eq.s32.totalorder %s27, 0
      %p323 = por %p321, %p322
      %p324 = scmp.ne.s32.totalorder %s316, %s318
      %p325 = scmp.eq.s32.totalorder %s32, 1
      %p326 = por %p324, %p325
      %p327 = scmp.ne.s32.totalorder %s318, %s319
      %p328 = scmp.eq.s32.totalorder %s32, 0
      %p329 = por %p327, %p328
      %p330 = scmp.ne.s32.totalorder %s318, %s319
      %p331 = scmp.eq.s32.totalorder %s33, 1
      %p332 = por %p330, %p331
      %p334 = scmp.ne.s32.totalorder %s319, %s333
      %p335 = scmp.eq.s32.totalorder %s33, 0
      %p336 = por %p334, %p335
      %s338 = sadd.s32 %s337, 1
      %p341 = scmp.eq.s32.totalorder %s27, 1
      %p342 = scmp.ne.s32.totalorder %s337, %s339
      %p343 = scmp.eq.s32.totalorder %s27, 0
      %p344 = por %p342, %p343
      %p345 = scmp.ne.s32.totalorder %s337, %s339
      %p346 = scmp.eq.s32.totalorder %s32, 1
      %p347 = por %p345, %p346
      %p348 = scmp.ne.s32.totalorder %s339, %s340
      %p349 = scmp.eq.s32.totalorder %s32, 0
      %p350 = por %p348, %p349
      %p351 = scmp.ne.s32.totalorder %s339, %s340
      %p352 = scmp.eq.s32.totalorder %s33, 1
      %p353 = por %p351, %p352
      %p355 = scmp.ne.s32.totalorder %s340, %s354
      %p356 = scmp.eq.s32.totalorder %s33, 0
      %p357 = por %p355, %p356
      %s359 = sadd.s32 %s358, 1
      %p362 = scmp.eq.s32.totalorder %s27, 1
      %p363 = scmp.ne.s32.totalorder %s358, %s360
      %p364 = scmp.eq.s32.totalorder %s27, 0
      %p365 = por %p363, %p364
      %p366 = scmp.ne.s32.totalorder %s358, %s360
      %p367 = scmp.eq.s32.totalorder %s32, 1
      %p368 = por %p366, %p367
      %p369 = scmp.ne.s32.totalorder %s360, %s361
      %p370 = scmp.eq.s32.totalorder %s32, 0
      %p371 = por %p369, %p370
      %p372 = scmp.ne.s32.totalorder %s360, %s361
      %p373 = scmp.eq.s32.totalorder %s33, 1
      %p374 = por %p372, %p373
      %p376 = scmp.ne.s32.totalorder %s361, %s375
      %p377 = scmp.eq.s32.totalorder %s33, 0
      %p378 = por %p376, %p377
      %s380 = sadd.s32 %s379, 1
      %p383 = scmp.eq.s32.totalorder %s27, 1
      %p384 = scmp.ne.s32.totalorder %s379, %s381
      %p385 = scmp.eq.s32.totalorder %s27, 0
      %p386 = por %p384, %p385
      %p387 = scmp.ne.s32.totalorder %s379, %s381
      %p388 = scmp.eq.s32.totalorder %s32, 1
      %p389 = por %p387, %p388
      %p390 = scmp.ne.s32.totalorder %s381, %s382
      %p391 = scmp.eq.s32.totalorder %s32, 0
      %p392 = por %p390, %p391
      %p393 = scmp.ne.s32.totalorder %s381, %s382
      %p394 = scmp.eq.s32.totalorder %s33, 1
      %p395 = por %p393, %p394
      %p397 = scmp.ne.s32.totalorder %s382, %s396
      %p398 = scmp.eq.s32.totalorder %s33, 0
      %p399 = por %p397, %p398
      %s401 = sadd.s32 %s400, 1
      %p404 = scmp.eq.s32.totalorder %s27, 1
      %p405 = scmp.ne.s32.totalorder %s400, %s402
      %p406 = scmp.eq.s32.totalorder %s27, 0
      %p407 = por %p405, %p406
      %p408 = scmp.ne.s32.totalorder %s400, %s402
      %p409 = scmp.eq.s32.totalorder %s32, 1
      %p410 = por %p408, %p409
      %p411 = scmp.ne.s32.totalorder %s402, %s403
      %p412 = scmp.eq.s32.totalorder %s32, 0
      %p413 = por %p411, %p412
      %p414 = scmp.ne.s32.totalorder %s402, %s403
      %p415 = scmp.eq.s32.totalorder %s33, 1
      %p416 = por %p414, %p415
      %p418 = scmp.ne.s32.totalorder %s403, %s417
      %p419 = scmp.eq.s32.totalorder %s33, 0
      %p420 = por %p418, %p419
      %s422 = sadd.s32 %s421, 1
      %p425 = scmp.eq.s32.totalorder %s27, 1
      %p426 = scmp.ne.s32.totalorder %s421, %s423
      %p427 = scmp.eq.s32.totalorder %s27, 0
      %p428 = por %p426, %p427
      %p429 = scmp.ne.s32.totalorder %s421, %s423
      %p430 = scmp.eq.s32.totalorder %s32, 1
      %p431 = por %p429, %p430
      %p432 = scmp.ne.s32.totalorder %s423, %s424
      %p433 = scmp.eq.s32.totalorder %s32, 0
      %p434 = por %p432, %p433
      %p435 = scmp.ne.s32.totalorder %s423, %s424
      %p436 = scmp.eq.s32.totalorder %s33, 1
      %p437 = por %p435, %p436
      %p439 = scmp.ne.s32.totalorder %s424, %s438
      %p440 = scmp.eq.s32.totalorder %s33, 0
      %p441 = por %p439, %p440
      %s442 = ssub.s32 %s34, %s46
      %s443 = ssub.s32 %s35, %s42
      %s444 = sor.u32 %s442, %s443
      %p445 = scmp.eq.s32.totalorder %s444, 0
      %s447 = sadd.s32 %s446, 1
      %s448 = scalar_select %p445, %s446, %s447
      %p451 = pneg %p445
      %p452 = scmp.eq.s32.totalorder %s27, 1
      %p453 = por %p451, %p452
      %p454 = scmp.ne.s32.totalorder %s446, %s449
      %p455 = scmp.eq.s32.totalorder %s27, 0
      %p456 = por %p454, %p455
      %p457 = scmp.ne.s32.totalorder %s446, %s449
      %p458 = scmp.eq.s32.totalorder %s32, 1
      %p459 = por %p457, %p458
      %p460 = scmp.ne.s32.totalorder %s449, %s450
      %p461 = scmp.eq.s32.totalorder %s32, 0
      %p462 = por %p460, %p461
      %p463 = scmp.ne.s32.totalorder %s449, %s450
      %p464 = scmp.eq.s32.totalorder %s33, 1
      %p465 = por %p463, %p464
      %p467 = scmp.ne.s32.totalorder %s450, %s466
      %p468 = scmp.eq.s32.totalorder %s33, 0
      %p469 = por %p467, %p468
      %p470 = scmp.le.s32.totalorder 1, %s27
      %p471 = scmp.lt.s32.totalorder %s27, 3
      %p472 = pnand %p470, %p471
      %p473 = pneg %p472
      // Predicated region
      $region9: #{tpu_custom_call.1} parent=5 // pred_check
        _
      $region10: #{tpu_custom_call.1} parent=5 // pred_check_branch
        %475 = sbr.rel (%p472) target = $region12
      $region11: #{tpu_custom_call.1} parent=5 // pred_region
        %s476 = ssub.s32 %s27, 1
        // Predicated region
        $region13: #{tpu_custom_call.1} parent=11 // pred_check
          %p477 = pneg %p140
        $region14: #{tpu_custom_call.1} parent=11 // pred_check_branch
          %479 = sbr.rel (%p477) target = $region16
        $region15: #{tpu_custom_call.1} parent=11 // pred_region
          _
        $region16: #{tpu_custom_call.1} parent=11 // pred_fallthru
          _
        // Predicated region
        $region17: #{tpu_custom_call.1} parent=11 // pred_check
          %p480 = pneg %p161
        $region18: #{tpu_custom_call.1} parent=11 // pred_check_branch
          %482 = sbr.rel (%p480) target = $region20
        $region19: #{tpu_custom_call.1} parent=11 // pred_region
          _
        $region20: #{tpu_custom_call.1} parent=11 // pred_fallthru
          _
        // Predicated region
        $region21: #{tpu_custom_call.1} parent=11 // pred_check
          %p483 = pneg %p182
        $region22: #{tpu_custom_call.1} parent=11 // pred_check_branch
          %485 = sbr.rel (%p483) target = $region24
        $region23: #{tpu_custom_call.1} parent=11 // pred_region
          _
        $region24: #{tpu_custom_call.1} parent=11 // pred_fallthru
          _
        // Predicated region
        $region25: #{tpu_custom_call.1} parent=11 // pred_check
          %p486 = pneg %p203
        $region26: #{tpu_custom_call.1} parent=11 // pred_check_branch
          %488 = sbr.rel (%p486) target = $region28
        $region27: #{tpu_custom_call.1} parent=11 // pred_region
          _
        $region28: #{tpu_custom_call.1} parent=11 // pred_fallthru
          _
        // Predicated region
        $region29: #{tpu_custom_call.1} parent=11 // pred_check
          %p489 = pneg %p224
        $region30: #{tpu_custom_call.1} parent=11 // pred_check_branch
          %491 = sbr.rel (%p489) target = $region32
        $region31: #{tpu_custom_call.1} parent=11 // pred_region
          _
        $region32: #{tpu_custom_call.1} parent=11 // pred_fallthru
          _
        // Predicated region
        $region33: #{tpu_custom_call.1} parent=11 // pred_check
          %p492 = pneg %p245
        $region34: #{tpu_custom_call.1} parent=11 // pred_check_branch
          %494 = sbr.rel (%p492) target = $region36
        $region35: #{tpu_custom_call.1} parent=11 // pred_region
          _
        $region36: #{tpu_custom_call.1} parent=11 // pred_fallthru
          _
        // Predicated region
        $region37: #{tpu_custom_call.1} parent=11 // pred_check
          %p495 = pneg %p266
        $region38: #{tpu_custom_call.1} parent=11 // pred_check_branch
          %497 = sbr.rel (%p495) target = $region40
        $region39: #{tpu_custom_call.1} parent=11 // pred_region
          _
        $region40: #{tpu_custom_call.1} parent=11 // pred_fallthru
          _
        // Predicated region
        $region41: #{tpu_custom_call.1} parent=11 // pred_check
          %p498 = pneg %p287
        $region42: #{tpu_custom_call.1} parent=11 // pred_check_branch
          %500 = sbr.rel (%p498) target = $region44
        $region43: #{tpu_custom_call.1} parent=11 // pred_region
          _
        $region44: #{tpu_custom_call.1} parent=11 // pred_fallthru
          _
        // Predicated region
        $region45: #{tpu_custom_call.1} parent=11 // pred_check
          %p501 = pneg %p308
        $region46: #{tpu_custom_call.1} parent=11 // pred_check_branch
          %503 = sbr.rel (%p501) target = $region48
        $region47: #{tpu_custom_call.1} parent=11 // pred_region
          _
        $region48: #{tpu_custom_call.1} parent=11 // pred_fallthru
          _
        // Predicated region
        $region49: #{tpu_custom_call.1} parent=11 // pred_check
          %p504 = pneg %p329
        $region50: #{tpu_custom_call.1} parent=11 // pred_check_branch
          %506 = sbr.rel (%p504) target = $region52
        $region51: #{tpu_custom_call.1} parent=11 // pred_region
          _
        $region52: #{tpu_custom_call.1} parent=11 // pred_fallthru
          _
        // Predicated region
        $region53: #{tpu_custom_call.1} parent=11 // pred_check
          %p507 = pneg %p350
        $region54: #{tpu_custom_call.1} parent=11 // pred_check_branch
          %509 = sbr.rel (%p507) target = $region56
        $region55: #{tpu_custom_call.1} parent=11 // pred_region
          _
        $region56: #{tpu_custom_call.1} parent=11 // pred_fallthru
          _
        // Predicated region
        $region57: #{tpu_custom_call.1} parent=11 // pred_check
          %p510 = pneg %p371
        $region58: #{tpu_custom_call.1} parent=11 // pred_check_branch
          %512 = sbr.rel (%p510) target = $region60
        $region59: #{tpu_custom_call.1} parent=11 // pred_region
          _
        $region60: #{tpu_custom_call.1} parent=11 // pred_fallthru
          _
        // Predicated region
        $region61: #{tpu_custom_call.1} parent=11 // pred_check
          %p513 = pneg %p392
        $region62: #{tpu_custom_call.1} parent=11 // pred_check_branch
          %515 = sbr.rel (%p513) target = $region64
        $region63: #{tpu_custom_call.1} parent=11 // pred_region
          _
        $region64: #{tpu_custom_call.1} parent=11 // pred_fallthru
          _
        // Predicated region
        $region65: #{tpu_custom_call.1} parent=11 // pred_check
          %p516 = pneg %p413
        $region66: #{tpu_custom_call.1} parent=11 // pred_check_branch
          %518 = sbr.rel (%p516) target = $region68
        $region67: #{tpu_custom_call.1} parent=11 // pred_region
          _
        $region68: #{tpu_custom_call.1} parent=11 // pred_fallthru
          _
        // Predicated region
        $region69: #{tpu_custom_call.1} parent=11 // pred_check
          %p519 = pneg %p434
        $region70: #{tpu_custom_call.1} parent=11 // pred_check_branch
          %521 = sbr.rel (%p519) target = $region72
        $region71: #{tpu_custom_call.1} parent=11 // pred_region
          _
        $region72: #{tpu_custom_call.1} parent=11 // pred_fallthru
          _
      $region12: #{tpu_custom_call.1} parent=5 // pred_fallthru
        _
      %p522 = scmp.lt.s32.totalorder %s27, 2
      // Predicated region
      $region73: #{tpu_custom_call.1} parent=5 // pred_check
        %p523 = pneg %p522
      $region74: #{tpu_custom_call.1} parent=5 // pred_check_branch
        %525 = sbr.rel (%p523) target = $region76
      $region75: #{tpu_custom_call.1} parent=5 // pred_region
        // Predicated region
        $region77: #{tpu_custom_call.1} parent=75 // pred_check
          %p526 = pneg %p61
        $region78: #{tpu_custom_call.1} parent=75 // pred_check_branch
          %528 = sbr.rel (%p526) target = $region80
        $region79: #{tpu_custom_call.1} parent=75 // pred_region
          %p529 = scmp.lt.s32.totalorder %s34, 1
          %s530 = scalar_select %p529, %s34, 1
          %p531 = scmp.lt.s32.totalorder %s35, 0
          %s532 = scalar_select %p531, %s35, 0
          %s533 = sadd.s32 %s532, %s530
          %s534 = smul.addr %s533, 8
          %s535 = scalar_lea.vmem %s0, %s534
        $region80: #{tpu_custom_call.1} parent=75 // pred_fallthru
          _
        // Predicated region
        $region81: #{tpu_custom_call.1} parent=75 // pred_check
          %p536 = pneg %p87
        $region82: #{tpu_custom_call.1} parent=75 // pred_check_branch
          %538 = sbr.rel (%p536) target = $region84
        $region83: #{tpu_custom_call.1} parent=75 // pred_region
          %p539 = scmp.lt.s32.totalorder %s34, 1
          %s540 = scalar_select %p539, %s34, 1
          %s541 = smul.addr %s540, 8
          %s542 = scalar_lea.vmem %s1, %s541
        $region84: #{tpu_custom_call.1} parent=75 // pred_fallthru
          _
        // Predicated region
        $region85: #{tpu_custom_call.1} parent=75 // pred_check
          %p543 = pneg %p113
        $region86: #{tpu_custom_call.1} parent=75 // pred_check_branch
          %545 = sbr.rel (%p543) target = $region88
        $region87: #{tpu_custom_call.1} parent=75 // pred_region
          %p546 = scmp.lt.s32.totalorder %s34, 1
          %s547 = scalar_select %p546, %s34, 1
          %s548 = smul.addr %s547, 8
          %s549 = scalar_lea.vmem %s2, %s548
        $region88: #{tpu_custom_call.1} parent=75 // pred_fallthru
          _
      $region76: #{tpu_custom_call.1} parent=5 // pred_fallthru
        _
      %p550 = scmp.le.s32.totalorder 1, %s27
      %p551 = scmp.lt.s32.totalorder %s27, 3
      %p552 = pnand %p550, %p551
      %p553 = pneg %p552
      // Predicated region
      $region89: #{tpu_custom_call.1} parent=5 // pred_check
        _
      $region90: #{tpu_custom_call.1} parent=5 // pred_check_branch
        %555 = sbr.rel (%p552) target = $region92
      $region91: #{tpu_custom_call.1} parent=5 // pred_region
        %s556 = ssub.s32 %s27, 1
        %p557 = scmp.lt.s32.totalorder %s36, 1
        %s558 = scalar_select %p557, %s36, 1
        %p559 = scmp.lt.s32.totalorder %s37, 0
        %s560 = scalar_select %p559, %s37, 0
        %s561 = sadd.s32 %s560, %s558
        %s562 = smul.addr %s561, 8
        %s563 = scalar_lea.vmem %s0, %s562
        %p564 = pneg %p67
        %p565 = pneg %p64
        %p566 = scmp.lt.s32.totalorder %s36, 1
        %s567 = scalar_select %p566, %s36, 1
        %s568 = smul.addr %s567, 8
        %s569 = scalar_lea.vmem %s1, %s568
        %p570 = pneg %p93
        %p571 = pneg %p90
        %p572 = scmp.lt.s32.totalorder %s36, 1
        %s573 = scalar_select %p572, %s36, 1
        %s574 = smul.addr %s573, 8
        %s575 = scalar_lea.vmem %s2, %s574
        %p576 = pneg %p119
        %p577 = pneg %p116
        %p578 = pneg %p140
        %p579 = pneg %p137
        %p580 = pneg %p161
        %p581 = pneg %p158
        %p582 = pneg %p182
        %p583 = pneg %p179
        %p584 = pneg %p203
        %p585 = pneg %p200
        %p586 = pneg %p224
        %p587 = pneg %p221
        %p588 = pneg %p245
        %p589 = pneg %p242
        %p590 = pneg %p266
        %p591 = pneg %p263
        %p592 = pneg %p287
        %p593 = pneg %p284
        %p594 = pneg %p308
        %p595 = pneg %p305
        %p596 = pneg %p329
        %p597 = pneg %p326
        %p598 = pneg %p350
        %p599 = pneg %p347
        %p600 = pneg %p371
        %p601 = pneg %p368
        %p602 = pneg %p392
        %p603 = pneg %p389
        %p604 = pneg %p413
        %p605 = pneg %p410
        %p606 = pneg %p434
        %p607 = pneg %p431
        %p608 = pneg %p462
        %p609 = pneg %p459
        %s610 = sand.u32 %s449, 1
        %s611 = scalar_lea.sflag [#allocation3], %s610
        %s612 = sand.u32 %s449, 1
        %s613 = smul.addr %s612, 8
        %s614 = scalar_lea.vmem [#allocation2], %s613
        %p615 = scmp.lt.s32.totalorder %s36, 1
        %s616 = scalar_select %p615, %s36, 1
        %p617 = scmp.lt.s32.totalorder %s37, 0
        %s618 = scalar_select %p617, %s37, 0
        %s619 = sadd.s32 %s618, %s616
        %s620 = smul.addr %s619, 8
        %s621 = scalar_lea.vmem %s0, %s620
        %p622 = scmp.lt.s32.totalorder %s36, 1
        %s623 = scalar_select %p622, %s36, 1
        %s624 = smul.addr %s623, 8
        %s625 = scalar_lea.vmem %s1, %s624
        %p626 = scmp.lt.s32.totalorder %s36, 1
        %s627 = scalar_select %p626, %s36, 1
        %s628 = smul.addr %s627, 8
        %s629 = scalar_lea.vmem %s2, %s628
        %v631 = vld [vmem:[%s621] sm:$0xff]
        %v632 = vld [vmem:[%s625] sm:$0xff]
        %v633 = vld [vmem:[%s629] sm:$0xff]
        %v634 = vld [vmem:[%s3] sm:$0xff]
        %v635 = vld [vmem:[%s3 + $0x8] sm:$0xff]
        %v636 = vld [vmem:[%s3 + $0x10] sm:$0xff]
        %v637 = vld [vmem:[%s3 + $0x18] sm:$0xff]
        %v638 = vld [vmem:[%s3 + $0x20] sm:$0xff]
        %v639 = vld [vmem:[%s3 + $0x28] sm:$0xff]
        %v640 = vld [vmem:[%s3 + $0x30] sm:$0xff]
        %v641 = vld [vmem:[%s3 + $0x38] sm:$0xff]
        %v642 = vld [vmem:[%s3 + $0x40] sm:$0xff]
        %v643 = vld [vmem:[%s3 + $0x48] sm:$0xff]
        %v644 = vld [vmem:[%s3 + $0x50] sm:$0xff]
        %v645 = vld [vmem:[%s3 + $0x58] sm:$0xff]
        %v646 = vld [vmem:[%s3 + $0x60] sm:$0xff]
        %v647 = vld [vmem:[%s3 + $0x68] sm:$0xff]
        %v648 = vld [vmem:[%s3 + $0x70] sm:$0xff]
        %v649 = vld [vmem:[%s3 + $0x78] sm:$0xff]
        %v650 = vpack.c.bf16 %v634, %v634
        %v651 = vpack.c.bf16 %v635, %v635
        %v652 = vpack.c.bf16 %v636, %v636
        %v653 = vpack.c.bf16 %v637, %v637
        %v654 = vpack.c.bf16 %v638, %v638
        %v655 = vpack.c.bf16 %v639, %v639
        %v656 = vpack.c.bf16 %v640, %v640
        %v657 = vpack.c.bf16 %v641, %v641
        %v658 = vpack.c.bf16 %v642, %v642
        %v659 = vpack.c.bf16 %v643, %v643
        %v660 = vpack.c.bf16 %v644, %v644
        %v661 = vpack.c.bf16 %v645, %v645
        %v662 = vpack.c.bf16 %v646, %v646
        %v663 = vpack.c.bf16 %v647, %v647
        %v664 = vpack.c.bf16 %v648, %v648
        %v665 = vpack.c.bf16 %v649, %v649
        %v666 = vld [vmem:[%s5] sm:$0xff]
        %v667 = vld [vmem:[%s5 + $0x8] sm:$0xff]
        %v668 = vld [vmem:[%s5 + $0x10] sm:$0xff]
        %v669 = vld [vmem:[%s5 + $0x18] sm:$0xff]
        %v670 = vld [vmem:[%s5 + $0x20] sm:$0xff]
        %v671 = vld [vmem:[%s5 + $0x28] sm:$0xff]
        %v672 = vld [vmem:[%s5 + $0x30] sm:$0xff]
        %v673 = vld [vmem:[%s5 + $0x38] sm:$0xff]
        %v674 = vld [vmem:[%s5 + $0x40] sm:$0xff]
        %v675 = vld [vmem:[%s5 + $0x48] sm:$0xff]
        %v676 = vld [vmem:[%s5 + $0x50] sm:$0xff]
        %v677 = vld [vmem:[%s5 + $0x58] sm:$0xff]
        %v678 = vld [vmem:[%s5 + $0x60] sm:$0xff]
        %v679 = vld [vmem:[%s5 + $0x68] sm:$0xff]
        %v680 = vld [vmem:[%s5 + $0x70] sm:$0xff]
        %v681 = vld [vmem:[%s5 + $0x78] sm:$0xff]
        %v682 = vpack.c.bf16 %v666, %v666
        %v683 = vpack.c.bf16 %v667, %v667
        %v684 = vpack.c.bf16 %v668, %v668
        %v685 = vpack.c.bf16 %v669, %v669
        %v686 = vpack.c.bf16 %v670, %v670
        %v687 = vpack.c.bf16 %v671, %v671
        %v688 = vpack.c.bf16 %v672, %v672
        %v689 = vpack.c.bf16 %v673, %v673
        %v690 = vpack.c.bf16 %v674, %v674
        %v691 = vpack.c.bf16 %v675, %v675
        %v692 = vpack.c.bf16 %v676, %v676
        %v693 = vpack.c.bf16 %v677, %v677
        %v694 = vpack.c.bf16 %v678, %v678
        %v695 = vpack.c.bf16 %v679, %v679
        %v696 = vpack.c.bf16 %v680, %v680
        %v697 = vpack.c.bf16 %v681, %v681
        %v698 = vpack.c.bf16 %v631, %v631
        %v699 = vpack.c.bf16 %v632, %v632
        %v700 = vpack.c.bf16 %v633, %v633
        %v701 = vld [vmem:[%s4] sm:$0x1]
        %v702 = vld [vmem:[%s4 + $0x1] sm:$0x1]
        %v703 = vld [vmem:[%s4 + $0x2] sm:$0x1]
        %v704 = vld [vmem:[%s4 + $0x3] sm:$0x1]
        %v709 = vperm.slane %v701, 0
        %v710 = vperm.slane %v702, 0
        %v711 = vperm.slane %v703, 0
        %v712 = vperm.slane %v704, 0
        %v721 = vunpack.c.l.b16 %v650
        %v722 = vunpack.c.l.b16 %v651
        %v723 = vunpack.c.l.b16 %v652
        %v724 = vunpack.c.l.b16 %v653
        %v725 = vpack.c.b16 %v722, %v721
        %v726 = vpack.c.b16 %v724, %v723
        %vm729 = vcmask 261120
        %v731 = vsel %vm729, %v698, 0
        %733 = vmatpush.bf16.msra.mxu0 0
        %734 = vmatpush.bf16.msra.mxu0 0
        %735 = vmatpush.bf16.msra.mxu0 0
        %736 = vmatpush.bf16.msra.mxu0 0
        %737 = vmatpush.bf16.msra.mxu0 0
        %738 = vmatpush.bf16.msra.mxu0 0
        %739 = vmatpush.bf16.msra.mxu0 %v726
        %740 = vmatpush.bf16.msra.mxu0 %v725
        %741 = vmatmul.bf16.gmra.mxu0 %v731
        %v742 = vpop.f32.mrf.mxu0
        %v743 = vadd.f32 %v709, %v742
        %v744 = vpop.f32.mrf.mxu0
        %745 = vdwg.mxu0
        %v750 = vunpack.c.l.b16 %v654
        %v751 = vunpack.c.l.b16 %v655
        %v752 = vunpack.c.l.b16 %v656
        %v753 = vunpack.c.l.b16 %v657
        %v754 = vpack.c.b16 %v751, %v750
        %v755 = vpack.c.b16 %v753, %v752
        %758 = vmatpush.bf16.msra.mxu0 0
        %759 = vmatpush.bf16.msra.mxu0 0
        %760 = vmatpush.bf16.msra.mxu0 0
        %761 = vmatpush.bf16.msra.mxu0 0
        %762 = vmatpush.bf16.msra.mxu0 0
        %763 = vmatpush.bf16.msra.mxu0 0
        %764 = vmatpush.bf16.msra.mxu0 %v755
        %765 = vmatpush.bf16.msra.mxu0 %v754
        %766 = vmatmul.bf16.gmra.mxu0 %v731
        %v767 = vpop.f32.mrf.mxu0
        %v768 = vadd.f32 %v710, %v767
        %v769 = vpop.f32.mrf.mxu0
        %770 = vdwg.mxu0
        %v775 = vunpack.c.l.b16 %v658
        %v776 = vunpack.c.l.b16 %v659
        %v777 = vunpack.c.l.b16 %v660
        %v778 = vunpack.c.l.b16 %v661
        %v779 = vpack.c.b16 %v776, %v775
        %v780 = vpack.c.b16 %v778, %v777
        %783 = vmatpush.bf16.msra.mxu0 0
        %784 = vmatpush.bf16.msra.mxu0 0
        %785 = vmatpush.bf16.msra.mxu0 0
        %786 = vmatpush.bf16.msra.mxu0 0
        %787 = vmatpush.bf16.msra.mxu0 0
        %788 = vmatpush.bf16.msra.mxu0 0
        %789 = vmatpush.bf16.msra.mxu0 %v780
        %790 = vmatpush.bf16.msra.mxu0 %v779
        %791 = vmatmul.bf16.gmra.mxu0 %v731
        %v792 = vpop.f32.mrf.mxu0
        %v793 = vadd.f32 %v711, %v792
        %v794 = vpop.f32.mrf.mxu0
        %795 = vdwg.mxu0
        %v800 = vunpack.c.l.b16 %v662
        %v801 = vunpack.c.l.b16 %v663
        %v802 = vunpack.c.l.b16 %v664
        %v803 = vunpack.c.l.b16 %v665
        %v804 = vpack.c.b16 %v801, %v800
        %v805 = vpack.c.b16 %v803, %v802
        %808 = vmatpush.bf16.msra.mxu0 0
        %809 = vmatpush.bf16.msra.mxu0 0
        %810 = vmatpush.bf16.msra.mxu0 0
        %811 = vmatpush.bf16.msra.mxu0 0
        %812 = vmatpush.bf16.msra.mxu0 0
        %813 = vmatpush.bf16.msra.mxu0 0
        %814 = vmatpush.bf16.msra.mxu0 %v805
        %815 = vmatpush.bf16.msra.mxu0 %v804
        %816 = vmatmul.bf16.gmra.mxu0 %v731
        %v817 = vpop.f32.mrf.mxu0
        %v818 = vadd.f32 %v712, %v817
        %v819 = vpop.f32.mrf.mxu0
        %820 = vdwg.mxu0
        %v821 = vld [vmem:[%s4] sm:$0x1]
        %v822 = vld [vmem:[%s4 + $0x1] sm:$0x1]
        %v823 = vld [vmem:[%s4 + $0x2] sm:$0x1]
        %v824 = vld [vmem:[%s4 + $0x3] sm:$0x1]
        %v829 = vperm.slane %v821, 0
        %v830 = vperm.slane %v822, 0
        %v831 = vperm.slane %v823, 0
        %v832 = vperm.slane %v824, 0
        %v838 = vsel %vm729, %v699, 0
        %840 = vmatpush.bf16.msra.mxu0 0
        %841 = vmatpush.bf16.msra.mxu0 0
        %842 = vmatpush.bf16.msra.mxu0 0
        %843 = vmatpush.bf16.msra.mxu0 0
        %844 = vmatpush.bf16.msra.mxu0 0
        %845 = vmatpush.bf16.msra.mxu0 0
        %846 = vmatpush.bf16.msra.mxu0 %v726
        %847 = vmatpush.bf16.msra.mxu0 %v725
        %848 = vmatmul.bf16.gmra.mxu0 %v838
        %v849 = vpop.f32.mrf.mxu0
        %v850 = vadd.f32 %v829, %v849
        %v851 = vpop.f32.mrf.mxu0
        %852 = vdwg.mxu0
        %853 = vmatpush.bf16.msra.mxu0 0
        %854 = vmatpush.bf16.msra.mxu0 0
        %855 = vmatpush.bf16.msra.mxu0 0
        %856 = vmatpush.bf16.msra.mxu0 0
        %857 = vmatpush.bf16.msra.mxu0 0
        %858 = vmatpush.bf16.msra.mxu0 0
        %859 = vmatpush.bf16.msra.mxu0 %v755
        %860 = vmatpush.bf16.msra.mxu0 %v754
        %861 = vmatmul.bf16.gmra.mxu0 %v838
        %v862 = vpop.f32.mrf.mxu0
        %v863 = vadd.f32 %v830, %v862
        %v864 = vpop.f32.mrf.mxu0
        %865 = vdwg.mxu0
        %866 = vmatpush.bf16.msra.mxu0 0
        %867 = vmatpush.bf16.msra.mxu0 0
        %868 = vmatpush.bf16.msra.mxu0 0
        %869 = vmatpush.bf16.msra.mxu0 0
        %870 = vmatpush.bf16.msra.mxu0 0
        %871 = vmatpush.bf16.msra.mxu0 0
        %872 = vmatpush.bf16.msra.mxu0 %v780
        %873 = vmatpush.bf16.msra.mxu0 %v779
        %874 = vmatmul.bf16.gmra.mxu0 %v838
        %v875 = vpop.f32.mrf.mxu0
        %v876 = vadd.f32 %v831, %v875
        %v877 = vpop.f32.mrf.mxu0
        %878 = vdwg.mxu0
        %879 = vmatpush.bf16.msra.mxu0 0
        %880 = vmatpush.bf16.msra.mxu0 0
        %881 = vmatpush.bf16.msra.mxu0 0
        %882 = vmatpush.bf16.msra.mxu0 0
        %883 = vmatpush.bf16.msra.mxu0 0
        %884 = vmatpush.bf16.msra.mxu0 0
        %885 = vmatpush.bf16.msra.mxu0 %v805
        %886 = vmatpush.bf16.msra.mxu0 %v804
        %887 = vmatmul.bf16.gmra.mxu0 %v838
        %v888 = vpop.f32.mrf.mxu0
        %v889 = vadd.f32 %v832, %v888
        %v890 = vpop.f32.mrf.mxu0
        %891 = vdwg.mxu0
        %v892 = vld [vmem:[%s6] sm:$0x1]
        %v893 = vld [vmem:[%s6 + $0x1] sm:$0x1]
        %v894 = vld [vmem:[%s6 + $0x2] sm:$0x1]
        %v895 = vld [vmem:[%s6 + $0x3] sm:$0x1]
        %v900 = vperm.slane %v892, 0
        %v901 = vperm.slane %v893, 0
        %v902 = vperm.slane %v894, 0
        %v903 = vperm.slane %v895, 0
        %v912 = vunpack.c.l.b16 %v682
        %v913 = vunpack.c.l.b16 %v683
        %v914 = vunpack.c.l.b16 %v684
        %v915 = vunpack.c.l.b16 %v685
        %v916 = vpack.c.b16 %v913, %v912
        %v917 = vpack.c.b16 %v915, %v914
        %v921 = vsel %vm729, %v700, 0
        %923 = vmatpush.bf16.msra.mxu0 0
        %924 = vmatpush.bf16.msra.mxu0 0
        %925 = vmatpush.bf16.msra.mxu0 0
        %926 = vmatpush.bf16.msra.mxu0 0
        %927 = vmatpush.bf16.msra.mxu0 0
        %928 = vmatpush.bf16.msra.mxu0 0
        %929 = vmatpush.bf16.msra.mxu0 %v917
        %930 = vmatpush.bf16.msra.mxu0 %v916
        %931 = vmatmul.bf16.gmra.mxu0 %v921
        %v932 = vpop.f32.mrf.mxu0
        %v933 = vadd.f32 %v900, %v932
        %v934 = vpop.f32.mrf.mxu0
        %935 = vdwg.mxu0
        %v940 = vunpack.c.l.b16 %v686
        %v941 = vunpack.c.l.b16 %v687
        %v942 = vunpack.c.l.b16 %v688
        %v943 = vunpack.c.l.b16 %v689
        %v944 = vpack.c.b16 %v941, %v940
        %v945 = vpack.c.b16 %v943, %v942
        %948 = vmatpush.bf16.msra.mxu0 0
        %949 = vmatpush.bf16.msra.mxu0 0
        %950 = vmatpush.bf16.msra.mxu0 0
        %951 = vmatpush.bf16.msra.mxu0 0
        %952 = vmatpush.bf16.msra.mxu0 0
        %953 = vmatpush.bf16.msra.mxu0 0
        %954 = vmatpush.bf16.msra.mxu0 %v945
        %955 = vmatpush.bf16.msra.mxu0 %v944
        %956 = vmatmul.bf16.gmra.mxu0 %v921
        %v957 = vpop.f32.mrf.mxu0
        %v958 = vadd.f32 %v901, %v957
        %v959 = vpop.f32.mrf.mxu0
        %960 = vdwg.mxu0
        %v965 = vunpack.c.l.b16 %v690
        %v966 = vunpack.c.l.b16 %v691
        %v967 = vunpack.c.l.b16 %v692
        %v968 = vunpack.c.l.b16 %v693
        %v969 = vpack.c.b16 %v966, %v965
        %v970 = vpack.c.b16 %v968, %v967
        %973 = vmatpush.bf16.msra.mxu0 0
        %974 = vmatpush.bf16.msra.mxu0 0
        %975 = vmatpush.bf16.msra.mxu0 0
        %976 = vmatpush.bf16.msra.mxu0 0
        %977 = vmatpush.bf16.msra.mxu0 0
        %978 = vmatpush.bf16.msra.mxu0 0
        %979 = vmatpush.bf16.msra.mxu0 %v970
        %980 = vmatpush.bf16.msra.mxu0 %v969
        %981 = vmatmul.bf16.gmra.mxu0 %v921
        %v982 = vpop.f32.mrf.mxu0
        %v983 = vadd.f32 %v902, %v982
        %v984 = vpop.f32.mrf.mxu0
        %985 = vdwg.mxu0
        %v990 = vunpack.c.l.b16 %v694
        %v991 = vunpack.c.l.b16 %v695
        %v992 = vunpack.c.l.b16 %v696
        %v993 = vunpack.c.l.b16 %v697
        %v994 = vpack.c.b16 %v991, %v990
        %v995 = vpack.c.b16 %v993, %v992
        %998 = vmatpush.bf16.msra.mxu0 0
        %999 = vmatpush.bf16.msra.mxu0 0
        %1000 = vmatpush.bf16.msra.mxu0 0
        %1001 = vmatpush.bf16.msra.mxu0 0
        %1002 = vmatpush.bf16.msra.mxu0 0
        %1003 = vmatpush.bf16.msra.mxu0 0
        %1004 = vmatpush.bf16.msra.mxu0 %v995
        %1005 = vmatpush.bf16.msra.mxu0 %v994
        %1006 = vmatmul.bf16.gmra.mxu0 %v921
        %v1007 = vpop.f32.mrf.mxu0
        %v1008 = vadd.f32 %v903, %v1007
        %v1009 = vpop.f32.mrf.mxu0
        %1010 = vdwg.mxu0
        %v1011 = vlaneseq
        %v1012 = vshrl.u32 %v1011, 7
        %v1013 = vlaneseq
        %v1014 = vand.u32 %v1013, 127
        %s1015 = smul.u32 %s37, 8
        %v1016 = vstv %s1015
        %v1017 = vadd.s32 %v1012, %v1016
        %v1018 = vadd.s32 %v1017, 4294967295
        %vm1019 = vcmp.le.s32.totalorder %v1014, %v1018
        %v1020 = vsel %vm1019, 1, 0
        %v1021 = vcvt.s32.f32 %v1020
        %v1022 = vsub.s32 %v1014, %v1017
        %vm1023 = vcmp.lt.s32.totalorder %v1022, 0
        %v1024 = vsub.s32 0, %v1022
        %v1025 = vsel %vm1023, %v1024, %v1022
        %v1026 = vcvt.s32.f32 %v1025
        %v1027 = vpack.c.bf16 %v743, %v743
        %v1028 = vpack.c.bf16 %v768, %v768
        %v1029 = vpack.c.bf16 %v793, %v793
        %v1030 = vpack.c.bf16 %v818, %v818
        %v1031 = vpack.c.bf16 %v850, %v850
        %v1032 = vpack.c.bf16 %v863, %v863
        %v1033 = vpack.c.bf16 %v876, %v876
        %v1034 = vpack.c.bf16 %v889, %v889
        %vm1035 = vcmask 64512
        %v1037 = vsel %vm1035, %v1027, 0
        %v1040 = vsel %vm1035, %v1031, 0
        %1042 = vmatpush.bf16.xpose.msra.mxu0 0
        %1043 = vmatpush.bf16.xpose.msra.mxu0 0
        %1044 = vmatpush.bf16.xpose.msra.mxu0 0
        %1045 = vmatpush.bf16.xpose.msra.mxu0 0
        %1046 = vmatpush.bf16.xpose.msra.mxu0 0
        %1047 = vmatpush.bf16.xpose.msra.mxu0 0
        %1048 = vmatpush.bf16.xpose.msra.mxu0 0
        %1049 = vmatpush.bf16.xpose.msra.mxu0 %v1040
        %1050 = vmatmul.bf16.gmra.mxu0 %v1037
        %v1051 = vpop.f32.mrf.mxu0
        %v1052 = vadd.f32 0.0, %v1051
        %v1053 = vpop.f32.mrf.mxu0
        %1054 = vdwg.mxu0
        %v1056 = vsel %vm1035, %v1028, 0
        %v1059 = vsel %vm1035, %v1032, 0
        %1061 = vmatpush.bf16.xpose.msra.mxu0 0
        %1062 = vmatpush.bf16.xpose.msra.mxu0 0
        %1063 = vmatpush.bf16.xpose.msra.mxu0 0
        %1064 = vmatpush.bf16.xpose.msra.mxu0 0
        %1065 = vmatpush.bf16.xpose.msra.mxu0 0
        %1066 = vmatpush.bf16.xpose.msra.mxu0 0
        %1067 = vmatpush.bf16.xpose.msra.mxu0 0
        %1068 = vmatpush.bf16.xpose.msra.mxu0 %v1059
        %1069 = vmatmul.bf16.gmra.mxu0 %v1056
        %v1070 = vpop.f32.mrf.mxu0
        %v1071 = vadd.f32 0.0, %v1070
        %v1072 = vpop.f32.mrf.mxu0
        %1073 = vdwg.mxu0
        %v1075 = vsel %vm1035, %v1029, 0
        %v1078 = vsel %vm1035, %v1033, 0
        %1080 = vmatpush.bf16.xpose.msra.mxu0 0
        %1081 = vmatpush.bf16.xpose.msra.mxu0 0
        %1082 = vmatpush.bf16.xpose.msra.mxu0 0
        %1083 = vmatpush.bf16.xpose.msra.mxu0 0
        %1084 = vmatpush.bf16.xpose.msra.mxu0 0
        %1085 = vmatpush.bf16.xpose.msra.mxu0 0
        %1086 = vmatpush.bf16.xpose.msra.mxu0 0
        %1087 = vmatpush.bf16.xpose.msra.mxu0 %v1078
        %1088 = vmatmul.bf16.gmra.mxu0 %v1075
        %v1089 = vpop.f32.mrf.mxu0
        %v1090 = vadd.f32 0.0, %v1089
        %v1091 = vpop.f32.mrf.mxu0
        %1092 = vdwg.mxu0
        %v1094 = vsel %vm1035, %v1030, 0
        %v1097 = vsel %vm1035, %v1034, 0
        %1099 = vmatpush.bf16.xpose.msra.mxu0 0
        %1100 = vmatpush.bf16.xpose.msra.mxu0 0
        %1101 = vmatpush.bf16.xpose.msra.mxu0 0
        %1102 = vmatpush.bf16.xpose.msra.mxu0 0
        %1103 = vmatpush.bf16.xpose.msra.mxu0 0
        %1104 = vmatpush.bf16.xpose.msra.mxu0 0
        %1105 = vmatpush.bf16.xpose.msra.mxu0 0
        %1106 = vmatpush.bf16.xpose.msra.mxu0 %v1097
        %1107 = vmatmul.bf16.gmra.mxu0 %v1094
        %v1108 = vpop.f32.mrf.mxu0
        %v1109 = vadd.f32 0.0, %v1108
        %v1110 = vpop.f32.mrf.mxu0
        %1111 = vdwg.mxu0
        %v1112 = vmul.f32 %v1052, 0.35355338
        %v1113 = vmul.f32 %v1071, 0.35355338
        %v1114 = vmul.f32 %v1090, 0.35355338
        %v1115 = vmul.f32 %v1109, 0.35355338
        %vm1116 = vcmp.eq.s32.totalorder %v1020, 1
        %v1117 = vsel %vm1116, %v1112, -1e+32
        %v1118 = vsel %vm1116, %v1113, -1e+32
        %v1119 = vsel %vm1116, %v1114, -1e+32
        %v1120 = vsel %vm1116, %v1115, -1e+32
        %v1121 = vsel %vm1035, %v1117, -inf
        %1122 = vmax.xlane.f32.xlu0 %v1121
        %v1123 = vpop.xlane.xlu0 %1122
        %v1124 = vsel %vm1035, %v1118, -inf
        %1125 = vmax.xlane.f32.xlu0 %v1124
        %v1126 = vpop.xlane.xlu0 %1125
        %v1127 = vsel %vm1035, %v1119, -inf
        %1128 = vmax.xlane.f32.xlu0 %v1127
        %v1129 = vpop.xlane.xlu0 %1128
        %v1130 = vsel %vm1035, %v1120, -inf
        %1131 = vmax.xlane.f32.xlu0 %v1130
        %v1132 = vpop.xlane.xlu0 %1131
        %v1133 = vsub.f32 %v1117, %v1123
        %v1134 = vsub.f32 %v1118, %v1126
        %v1135 = vsub.f32 %v1119, %v1129
        %v1136 = vsub.f32 %v1120, %v1132
        %v1137 = vmul.f32 %v1133, 1.442695
        %v1138 = vpow.pop %v1137
        %v1139 = vmul.f32 %v1134, 1.442695
        %v1140 = vpow.pop %v1139
        %v1141 = vmul.f32 %v1135, 1.442695
        %v1142 = vpow.pop %v1141
        %v1143 = vmul.f32 %v1136, 1.442695
        %v1144 = vpow.pop %v1143
        %v1145 = vsel %vm1035, %v1138, 0.0
        %1146 = vadd.xlane.f32.xlu0 %v1145
        %v1147 = vpop.xlane.xlu0 %1146
        %v1148 = vsel %vm1035, %v1140, 0.0
        %1149 = vadd.xlane.f32.xlu0 %v1148
        %v1150 = vpop.xlane.xlu0 %1149
        %v1151 = vsel %vm1035, %v1142, 0.0
        %1152 = vadd.xlane.f32.xlu0 %v1151
        %v1153 = vpop.xlane.xlu0 %1152
        %v1154 = vsel %vm1035, %v1144, 0.0
        %1155 = vadd.xlane.f32.xlu0 %v1154
        %v1156 = vpop.xlane.xlu0 %1155
        %v1157 = vrcp.pop %v1147
        %v1158 = vmul.f32 %v1147, %v1157
        %v1159 = vsub.f32 1.0, %v1158
        %v1160 = vmul.f32 %v1157, %v1159
        %v1161 = vadd.f32 %v1157, %v1160
        %vm1162 = vweird.f32 %v1147
        %vm1163 = vweird.f32 %v1157
        %vm1164 = vmor %vm1162, %vm1163
        %v1165 = vsel %vm1164, %v1157, %v1161
        %v1166 = vand.u32 2147483647, %v1147
        %vm1167 = vcmp.eq.f32.partialorder %v1166, 8.507059e+37
        %v1168 = vand.u32 %v1147, 2147483648
        %v1169 = vor.u32 1.1754944e-38, %v1168
        %v1170 = vsel %vm1167, %v1169, %v1165
        %v1171 = vrcp.pop %v1150
        %v1172 = vmul.f32 %v1150, %v1171
        %v1173 = vsub.f32 1.0, %v1172
        %v1174 = vmul.f32 %v1171, %v1173
        %v1175 = vadd.f32 %v1171, %v1174
        %vm1176 = vweird.f32 %v1150
        %vm1177 = vweird.f32 %v1171
        %vm1178 = vmor %vm1176, %vm1177
        %v1179 = vsel %vm1178, %v1171, %v1175
        %v1180 = vand.u32 2147483647, %v1150
        %vm1181 = vcmp.eq.f32.partialorder %v1180, 8.507059e+37
        %v1182 = vand.u32 %v1150, 2147483648
        %v1183 = vor.u32 1.1754944e-38, %v1182
        %v1184 = vsel %vm1181, %v1183, %v1179
        %v1185 = vrcp.pop %v1153
        %v1186 = vmul.f32 %v1153, %v1185
        %v1187 = vsub.f32 1.0, %v1186
        %v1188 = vmul.f32 %v1185, %v1187
        %v1189 = vadd.f32 %v1185, %v1188
        %vm1190 = vweird.f32 %v1153
        %vm1191 = vweird.f32 %v1185
        %vm1192 = vmor %vm1190, %vm1191
        %v1193 = vsel %vm1192, %v1185, %v1189
        %v1194 = vand.u32 2147483647, %v1153
        %vm1195 = vcmp.eq.f32.partialorder %v1194, 8.507059e+37
        %v1196 = vand.u32 %v1153, 2147483648
        %v1197 = vor.u32 1.1754944e-38, %v1196
        %v1198 = vsel %vm1195, %v1197, %v1193
        %v1199 = vrcp.pop %v1156
        %v1200 = vmul.f32 %v1156, %v1199
        %v1201 = vsub.f32 1.0, %v1200
        %v1202 = vmul.f32 %v1199, %v1201
        %v1203 = vadd.f32 %v1199, %v1202
        %vm1204 = vweird.f32 %v1156
        %vm1205 = vweird.f32 %v1199
        %vm1206 = vmor %vm1204, %vm1205
        %v1207 = vsel %vm1206, %v1199, %v1203
        %v1208 = vand.u32 2147483647, %v1156
        %vm1209 = vcmp.eq.f32.partialorder %v1208, 8.507059e+37
        %v1210 = vand.u32 %v1156, 2147483648
        %v1211 = vor.u32 1.1754944e-38, %v1210
        %v1212 = vsel %vm1209, %v1211, %v1207
        %v1213 = vmul.f32 %v1138, %v1170
        %v1214 = vmul.f32 %v1140, %v1184
        %v1215 = vmul.f32 %v1142, %v1198
        %v1216 = vmul.f32 %v1144, %v1212
        %v1217 = vmul.f32 %v1213, %v1021
        %v1218 = vmul.f32 %v1214, %v1021
        %v1219 = vmul.f32 %v1215, %v1021
        %v1220 = vmul.f32 %v1216, %v1021
        %vm1221 = vcmp.gt.s32.totalorder %v1012, %v1014
        %v1222 = vsel %vm1221, 1, 0
        %v1223 = vcvt.s32.f32 %v1222
        %v1224 = vpack.c.bf16 %v1223, %v1223
        %v1225 = vpack.c.bf16 %v1217, %v1217
        %v1226 = vpack.c.bf16 %v1218, %v1218
        %v1227 = vpack.c.bf16 %v1219, %v1219
        %v1228 = vpack.c.bf16 %v1220, %v1220
        %v1230 = vsel %vm1035, %v1225, 0
        %vm1232 = vcmask 1043456
        %v1234 = vsel %vm1232, %v1224, 0
        %1236 = vmatpush.bf16.msra.mxu0 0
        %1237 = vmatpush.bf16.msra.mxu0 0
        %1238 = vmatpush.bf16.msra.mxu0 0
        %1239 = vmatpush.bf16.msra.mxu0 0
        %1240 = vmatpush.bf16.msra.mxu0 0
        %1241 = vmatpush.bf16.msra.mxu0 0
        %1242 = vmatpush.bf16.msra.mxu0 0
        %1243 = vmatpush.bf16.msra.mxu0 %v1234
        %1244 = vmatmul.bf16.gmra.mxu0 %v1230
        %v1245 = vpop.f32.mrf.mxu0
        %v1246 = vadd.f32 0.0, %v1245
        %v1247 = vpop.f32.mrf.mxu0
        %1248 = vdwg.mxu0
        %v1250 = vsel %vm1035, %v1226, 0
        %1252 = vmatpush.bf16.msra.mxu0 0
        %1253 = vmatpush.bf16.msra.mxu0 0
        %1254 = vmatpush.bf16.msra.mxu0 0
        %1255 = vmatpush.bf16.msra.mxu0 0
        %1256 = vmatpush.bf16.msra.mxu0 0
        %1257 = vmatpush.bf16.msra.mxu0 0
        %1258 = vmatpush.bf16.msra.mxu0 0
        %1259 = vmatpush.bf16.msra.mxu0 %v1234
        %1260 = vmatmul.bf16.gmra.mxu0 %v1250
        %v1261 = vpop.f32.mrf.mxu0
        %v1262 = vadd.f32 0.0, %v1261
        %v1263 = vpop.f32.mrf.mxu0
        %1264 = vdwg.mxu0
        %v1266 = vsel %vm1035, %v1227, 0
        %1268 = vmatpush.bf16.msra.mxu0 0
        %1269 = vmatpush.bf16.msra.mxu0 0
        %1270 = vmatpush.bf16.msra.mxu0 0
        %1271 = vmatpush.bf16.msra.mxu0 0
        %1272 = vmatpush.bf16.msra.mxu0 0
        %1273 = vmatpush.bf16.msra.mxu0 0
        %1274 = vmatpush.bf16.msra.mxu0 0
        %1275 = vmatpush.bf16.msra.mxu0 %v1234
        %1276 = vmatmul.bf16.gmra.mxu0 %v1266
        %v1277 = vpop.f32.mrf.mxu0
        %v1278 = vadd.f32 0.0, %v1277
        %v1279 = vpop.f32.mrf.mxu0
        %1280 = vdwg.mxu0
        %v1282 = vsel %vm1035, %v1228, 0
        %1284 = vmatpush.bf16.msra.mxu0 0
        %1285 = vmatpush.bf16.msra.mxu0 0
        %1286 = vmatpush.bf16.msra.mxu0 0
        %1287 = vmatpush.bf16.msra.mxu0 0
        %1288 = vmatpush.bf16.msra.mxu0 0
        %1289 = vmatpush.bf16.msra.mxu0 0
        %1290 = vmatpush.bf16.msra.mxu0 0
        %1291 = vmatpush.bf16.msra.mxu0 %v1234
        %1292 = vmatmul.bf16.gmra.mxu0 %v1282
        %v1293 = vpop.f32.mrf.mxu0
        %v1294 = vadd.f32 0.0, %v1293
        %v1295 = vpop.f32.mrf.mxu0
        %1296 = vdwg.mxu0
        %v1297 = vmul.f32 %v1246, %v1026
        %v1298 = vmul.f32 %v1262, %v1026
        %v1299 = vmul.f32 %v1278, %v1026
        %v1300 = vmul.f32 %v1294, %v1026
        %v1301 = vmax.f32 %v1297, 0.0
        %v1302 = vmax.f32 %v1298, 0.0
        %v1303 = vmax.f32 %v1299, 0.0
        %v1304 = vmax.f32 %v1300, 0.0
        %v1305 = vrsqrt.pop %v1301
        %v1306 = vmul.f32 %v1305, %v1301
        %v1307 = vmul.f32 %v1306, %v1305
        %v1308 = vmul.f32 0.5, %v1307
        %v1309 = vsub.f32 1.5, %v1308
        %v1310 = vmul.f32 %v1305, %v1309
        %v1311 = vmul.f32 %v1301, %v1310
        %vm1312 = vcmp.eq.f32.partialorder %v1301, inf
        %v1313 = vsel %vm1312, %v1301, %v1311
        %vm1314 = vcmp.eq.f32.partialorder %v1301, 0.0
        %v1315 = vand.u32 %v1301, 2147483648
        %v1316 = vsel %vm1314, %v1315, %v1313
        %v1317 = vrsqrt.pop %v1302
        %v1318 = vmul.f32 %v1317, %v1302
        %v1319 = vmul.f32 %v1318, %v1317
        %v1320 = vmul.f32 0.5, %v1319
        %v1321 = vsub.f32 1.5, %v1320
        %v1322 = vmul.f32 %v1317, %v1321
        %v1323 = vmul.f32 %v1302, %v1322
        %vm1324 = vcmp.eq.f32.partialorder %v1302, inf
        %v1325 = vsel %vm1324, %v1302, %v1323
        %vm1326 = vcmp.eq.f32.partialorder %v1302, 0.0
        %v1327 = vand.u32 %v1302, 2147483648
        %v1328 = vsel %vm1326, %v1327, %v1325
        %v1329 = vrsqrt.pop %v1303
        %v1330 = vmul.f32 %v1329, %v1303
        %v1331 = vmul.f32 %v1330, %v1329
        %v1332 = vmul.f32 0.5, %v1331
        %v1333 = vsub.f32 1.5, %v1332
        %v1334 = vmul.f32 %v1329, %v1333
        %v1335 = vmul.f32 %v1303, %v1334
        %vm1336 = vcmp.eq.f32.partialorder %v1303, inf
        %v1337 = vsel %vm1336, %v1303, %v1335
        %vm1338 = vcmp.eq.f32.partialorder %v1303, 0.0
        %v1339 = vand.u32 %v1303, 2147483648
        %v1340 = vsel %vm1338, %v1339, %v1337
        %v1341 = vrsqrt.pop %v1304
        %v1342 = vmul.f32 %v1341, %v1304
        %v1343 = vmul.f32 %v1342, %v1341
        %v1344 = vmul.f32 0.5, %v1343
        %v1345 = vsub.f32 1.5, %v1344
        %v1346 = vmul.f32 %v1341, %v1345
        %v1347 = vmul.f32 %v1304, %v1346
        %vm1348 = vcmp.eq.f32.partialorder %v1304, inf
        %v1349 = vsel %vm1348, %v1304, %v1347
        %vm1350 = vcmp.eq.f32.partialorder %v1304, 0.0
        %v1351 = vand.u32 %v1304, 2147483648
        %v1352 = vsel %vm1350, %v1351, %v1349
        %v1353 = vld [vmem:[%s7] sm:$0x1]
        %v1354 = vld [vmem:[%s7 + $0x1] sm:$0x1]
        %v1355 = vld [vmem:[%s7 + $0x2] sm:$0x1]
        %v1356 = vld [vmem:[%s7 + $0x3] sm:$0x1]
        %v1357 = vmax.f32 %v1353, 0.0
        %v1358 = vmax.f32 %v1354, 0.0
        %v1359 = vmax.f32 %v1355, 0.0
        %v1360 = vmax.f32 %v1356, 0.0
        %v1361 = vand.u32 2147483647, %v1353
        %v1362 = vand.u32 2147483647, %v1354
        %v1363 = vand.u32 2147483647, %v1355
        %v1364 = vand.u32 2147483647, %v1356
        %v1365 = vsub.f32 0.0, %v1361
        %v1366 = vsub.f32 0.0, %v1362
        %v1367 = vsub.f32 0.0, %v1363
        %v1368 = vsub.f32 0.0, %v1364
        %v1369 = vmul.f32 %v1365, 1.442695
        %v1370 = vpow.pop %v1369
        %v1371 = vmul.f32 %v1366, 1.442695
        %v1372 = vpow.pop %v1371
        %v1373 = vmul.f32 %v1367, 1.442695
        %v1374 = vpow.pop %v1373
        %v1375 = vmul.f32 %v1368, 1.442695
        %v1376 = vpow.pop %v1375
        %v1377 = vadd.f32 %v1370, 1.0
        %v1378 = vlog2.pop %v1377
        %v1379 = vmul.f32 %v1378, 0.6931472
        %v1380 = vmul.f32 -0.5, %v1370
        %v1381 = vadd.f32 %v1380, 1.0
        %v1382 = vmul.f32 %v1381, %v1370
        %v1383 = vand.u32 2147483647, %v1370
        %vm1384 = vcmp.lt.f32.partialorder %v1383, 0.0004427343
        %v1385 = vsel %vm1384, %v1382, %v1379
        %v1386 = vadd.f32 %v1372, 1.0
        %v1387 = vlog2.pop %v1386
        %v1388 = vmul.f32 %v1387, 0.6931472
        %v1389 = vmul.f32 -0.5, %v1372
        %v1390 = vadd.f32 %v1389, 1.0
        %v1391 = vmul.f32 %v1390, %v1372
        %v1392 = vand.u32 2147483647, %v1372
        %vm1393 = vcmp.lt.f32.partialorder %v1392, 0.0004427343
        %v1394 = vsel %vm1393, %v1391, %v1388
        %v1395 = vadd.f32 %v1374, 1.0
        %v1396 = vlog2.pop %v1395
        %v1397 = vmul.f32 %v1396, 0.6931472
        %v1398 = vmul.f32 -0.5, %v1374
        %v1399 = vadd.f32 %v1398, 1.0
        %v1400 = vmul.f32 %v1399, %v1374
        %v1401 = vand.u32 2147483647, %v1374
        %vm1402 = vcmp.lt.f32.partialorder %v1401, 0.0004427343
        %v1403 = vsel %vm1402, %v1400, %v1397
        %v1404 = vadd.f32 %v1376, 1.0
        %v1405 = vlog2.pop %v1404
        %v1406 = vmul.f32 %v1405, 0.6931472
        %v1407 = vmul.f32 -0.5, %v1376
        %v1408 = vadd.f32 %v1407, 1.0
        %v1409 = vmul.f32 %v1408, %v1376
        %v1410 = vand.u32 2147483647, %v1376
        %vm1411 = vcmp.lt.f32.partialorder %v1410, 0.0004427343
        %v1412 = vsel %vm1411, %v1409, %v1406
        %v1413 = vadd.f32 %v1357, %v1385
        %v1414 = vadd.f32 %v1358, %v1394
        %v1415 = vadd.f32 %v1359, %v1403
        %v1416 = vadd.f32 %v1360, %v1412
        %v1417 = vsub.f32 0.0, %v1413
        %v1418 = vsub.f32 0.0, %v1414
        %v1419 = vsub.f32 0.0, %v1415
        %v1420 = vsub.f32 0.0, %v1416
        %v1425 = vperm.slane %v1417, 0
        %v1426 = vperm.slane %v1418, 0
        %v1427 = vperm.slane %v1419, 0
        %v1428 = vperm.slane %v1420, 0
        %1429 = vset.pattern.permute.xlu0 0
        %1430 = vperm.xlu0 %1429, %v1425
        %v1431 = vpop.permute.xlu0 %1430
        %1433 = vset.pattern.permute.xlu0 0
        %1434 = vperm.xlu0 %1433, %v1426
        %v1435 = vpop.permute.xlu0 %1434
        %1437 = vset.pattern.permute.xlu0 0
        %1438 = vperm.xlu0 %1437, %v1427
        %v1439 = vpop.permute.xlu0 %1438
        %1441 = vset.pattern.permute.xlu0 0
        %1442 = vperm.xlu0 %1441, %v1428
        %v1443 = vpop.permute.xlu0 %1442
        %v1445 = vmul.f32 %v1316, %v1431
        %v1446 = vmul.f32 %v1328, %v1435
        %v1447 = vmul.f32 %v1340, %v1439
        %v1448 = vmul.f32 %v1352, %v1443
        %v1449 = vmul.f32 %v1445, 1.442695
        %v1450 = vpow.pop %v1449
        %v1451 = vmul.f32 %v1446, 1.442695
        %v1452 = vpow.pop %v1451
        %v1453 = vmul.f32 %v1447, 1.442695
        %v1454 = vpow.pop %v1453
        %v1455 = vmul.f32 %v1448, 1.442695
        %v1456 = vpow.pop %v1455
        %v1457 = vmax.f32 %v1450, 1e-05
        %v1458 = vmax.f32 %v1452, 1e-05
        %v1459 = vmax.f32 %v1454, 1e-05
        %v1460 = vmax.f32 %v1456, 1e-05
        %v1461 = vmin.f32 %v1457, 100000.0
        %v1462 = vmin.f32 %v1458, 100000.0
        %v1463 = vmin.f32 %v1459, 100000.0
        %v1464 = vmin.f32 %v1460, 100000.0
        %v1465 = vmul.f32 %v1112, %v1461
        %v1466 = vmul.f32 %v1113, %v1462
        %v1467 = vmul.f32 %v1114, %v1463
        %v1468 = vmul.f32 %v1115, %v1464
        %v1469 = vsel %vm1116, %v1465, -1e+32
        %v1470 = vsel %vm1116, %v1466, -1e+32
        %v1471 = vsel %vm1116, %v1467, -1e+32
        %v1472 = vsel %vm1116, %v1468, -1e+32
        %v1473 = vsel %vm1035, %v1469, -inf
        %1474 = vmax.xlane.f32.xlu0 %v1473
        %v1475 = vpop.xlane.xlu0 %1474
        %v1476 = vsel %vm1035, %v1470, -inf
        %1477 = vmax.xlane.f32.xlu0 %v1476
        %v1478 = vpop.xlane.xlu0 %1477
        %v1479 = vsel %vm1035, %v1471, -inf
        %1480 = vmax.xlane.f32.xlu0 %v1479
        %v1481 = vpop.xlane.xlu0 %1480
        %v1482 = vsel %vm1035, %v1472, -inf
        %1483 = vmax.xlane.f32.xlu0 %v1482
        %v1484 = vpop.xlane.xlu0 %1483
        %v1485 = vsub.f32 %v1469, %v1475
        %v1486 = vsub.f32 %v1470, %v1478
        %v1487 = vsub.f32 %v1471, %v1481
        %v1488 = vsub.f32 %v1472, %v1484
        %v1489 = vmul.f32 %v1485, 1.442695
        %v1490 = vpow.pop %v1489
        %v1491 = vmul.f32 %v1486, 1.442695
        %v1492 = vpow.pop %v1491
        %v1493 = vmul.f32 %v1487, 1.442695
        %v1494 = vpow.pop %v1493
        %v1495 = vmul.f32 %v1488, 1.442695
        %v1496 = vpow.pop %v1495
        %v1497 = vsel %vm1035, %v1490, 0.0
        %1498 = vadd.xlane.f32.xlu0 %v1497
        %v1499 = vpop.xlane.xlu0 %1498
        %v1500 = vsel %vm1035, %v1492, 0.0
        %1501 = vadd.xlane.f32.xlu0 %v1500
        %v1502 = vpop.xlane.xlu0 %1501
        %v1503 = vsel %vm1035, %v1494, 0.0
        %1504 = vadd.xlane.f32.xlu0 %v1503
        %v1505 = vpop.xlane.xlu0 %1504
        %v1506 = vsel %vm1035, %v1496, 0.0
        %1507 = vadd.xlane.f32.xlu0 %v1506
        %v1508 = vpop.xlane.xlu0 %1507
        %v1509 = vrcp.pop %v1499
        %v1510 = vmul.f32 %v1499, %v1509
        %v1511 = vsub.f32 1.0, %v1510
        %v1512 = vmul.f32 %v1509, %v1511
        %v1513 = vadd.f32 %v1509, %v1512
        %vm1514 = vweird.f32 %v1499
        %vm1515 = vweird.f32 %v1509
        %vm1516 = vmor %vm1514, %vm1515
        %v1517 = vsel %vm1516, %v1509, %v1513
        %v1518 = vand.u32 2147483647, %v1499
        %vm1519 = vcmp.eq.f32.partialorder %v1518, 8.507059e+37
        %v1520 = vand.u32 %v1499, 2147483648
        %v1521 = vor.u32 1.1754944e-38, %v1520
        %v1522 = vsel %vm1519, %v1521, %v1517
        %v1523 = vrcp.pop %v1502
        %v1524 = vmul.f32 %v1502, %v1523
        %v1525 = vsub.f32 1.0, %v1524
        %v1526 = vmul.f32 %v1523, %v1525
        %v1527 = vadd.f32 %v1523, %v1526
        %vm1528 = vweird.f32 %v1502
        %vm1529 = vweird.f32 %v1523
        %vm1530 = vmor %vm1528, %vm1529
        %v1531 = vsel %vm1530, %v1523, %v1527
        %v1532 = vand.u32 2147483647, %v1502
        %vm1533 = vcmp.eq.f32.partialorder %v1532, 8.507059e+37
        %v1534 = vand.u32 %v1502, 2147483648
        %v1535 = vor.u32 1.1754944e-38, %v1534
        %v1536 = vsel %vm1533, %v1535, %v1531
        %v1537 = vrcp.pop %v1505
        %v1538 = vmul.f32 %v1505, %v1537
        %v1539 = vsub.f32 1.0, %v1538
        %v1540 = vmul.f32 %v1537, %v1539
        %v1541 = vadd.f32 %v1537, %v1540
        %vm1542 = vweird.f32 %v1505
        %vm1543 = vweird.f32 %v1537
        %vm1544 = vmor %vm1542, %vm1543
        %v1545 = vsel %vm1544, %v1537, %v1541
        %v1546 = vand.u32 2147483647, %v1505
        %vm1547 = vcmp.eq.f32.partialorder %v1546, 8.507059e+37
        %v1548 = vand.u32 %v1505, 2147483648
        %v1549 = vor.u32 1.1754944e-38, %v1548
        %v1550 = vsel %vm1547, %v1549, %v1545
        %v1551 = vrcp.pop %v1508
        %v1552 = vmul.f32 %v1508, %v1551
        %v1553 = vsub.f32 1.0, %v1552
        %v1554 = vmul.f32 %v1551, %v1553
        %v1555 = vadd.f32 %v1551, %v1554
        %vm1556 = vweird.f32 %v1508
        %vm1557 = vweird.f32 %v1551
        %vm1558 = vmor %vm1556, %vm1557
        %v1559 = vsel %vm1558, %v1551, %v1555
        %v1560 = vand.u32 2147483647, %v1508
        %vm1561 = vcmp.eq.f32.partialorder %v1560, 8.507059e+37
        %v1562 = vand.u32 %v1508, 2147483648
        %v1563 = vor.u32 1.1754944e-38, %v1562
        %v1564 = vsel %vm1561, %v1563, %v1559
        %v1565 = vmul.f32 %v1490, %v1522
        %v1566 = vmul.f32 %v1492, %v1536
        %v1567 = vmul.f32 %v1494, %v1550
        %v1568 = vmul.f32 %v1496, %v1564
        %vm1569 = vcmp.eq.s32.totalorder %v1017, 0
        %v1570 = vsel %vm1569, 1, 0
        %vm1571 = vcmp.eq.s32.totalorder %v1570, 1
        %v1572 = vsel %vm1571, 0.0, %v1565
        %v1573 = vsel %vm1571, 0.0, %v1566
        %v1574 = vsel %vm1571, 0.0, %v1567
        %v1575 = vsel %vm1571, 0.0, %v1568
        %v1576 = vpack.c.bf16 %v1572, %v1572
        %v1577 = vpack.c.bf16 %v1573, %v1573
        %v1578 = vpack.c.bf16 %v1574, %v1574
        %v1579 = vpack.c.bf16 %v1575, %v1575
        %v1580 = vpack.c.bf16 %v933, %v933
        %v1581 = vpack.c.bf16 %v958, %v958
        %v1582 = vpack.c.bf16 %v983, %v983
        %v1583 = vpack.c.bf16 %v1008, %v1008
        %v1585 = vsel %vm1035, %v1576, 0
        %v1588 = vsel %vm1232, %v1580, 0
        %1590 = vmatpush.bf16.msra.mxu0 0
        %1591 = vmatpush.bf16.msra.mxu0 0
        %1592 = vmatpush.bf16.msra.mxu0 0
        %1593 = vmatpush.bf16.msra.mxu0 0
        %1594 = vmatpush.bf16.msra.mxu0 0
        %1595 = vmatpush.bf16.msra.mxu0 0
        %1596 = vmatpush.bf16.msra.mxu0 0
        %1597 = vmatpush.bf16.msra.mxu0 %v1588
        %1598 = vmatmul.bf16.gmra.mxu0 %v1585
        %v1599 = vpop.f32.mrf.mxu0
        %v1600 = vadd.f32 0.0, %v1599
        %v1601 = vpop.f32.mrf.mxu0
        %1602 = vdwg.mxu0
        %v1604 = vsel %vm1035, %v1577, 0
        %v1607 = vsel %vm1232, %v1581, 0
        %1609 = vmatpush.bf16.msra.mxu0 0
        %1610 = vmatpush.bf16.msra.mxu0 0
        %1611 = vmatpush.bf16.msra.mxu0 0
        %1612 = vmatpush.bf16.msra.mxu0 0
        %1613 = vmatpush.bf16.msra.mxu0 0
        %1614 = vmatpush.bf16.msra.mxu0 0
        %1615 = vmatpush.bf16.msra.mxu0 0
        %1616 = vmatpush.bf16.msra.mxu0 %v1607
        %1617 = vmatmul.bf16.gmra.mxu0 %v1604
        %v1618 = vpop.f32.mrf.mxu0
        %v1619 = vadd.f32 0.0, %v1618
        %v1620 = vpop.f32.mrf.mxu0
        %1621 = vdwg.mxu0
        %v1623 = vsel %vm1035, %v1578, 0
        %v1626 = vsel %vm1232, %v1582, 0
        %1628 = vmatpush.bf16.msra.mxu0 0
        %1629 = vmatpush.bf16.msra.mxu0 0
        %1630 = vmatpush.bf16.msra.mxu0 0
        %1631 = vmatpush.bf16.msra.mxu0 0
        %1632 = vmatpush.bf16.msra.mxu0 0
        %1633 = vmatpush.bf16.msra.mxu0 0
        %1634 = vmatpush.bf16.msra.mxu0 0
        %1635 = vmatpush.bf16.msra.mxu0 %v1626
        %1636 = vmatmul.bf16.gmra.mxu0 %v1623
        %v1637 = vpop.f32.mrf.mxu0
        %v1638 = vadd.f32 0.0, %v1637
        %v1639 = vpop.f32.mrf.mxu0
        %1640 = vdwg.mxu0
        %v1642 = vsel %vm1035, %v1579, 0
        %v1645 = vsel %vm1232, %v1583, 0
        %1647 = vmatpush.bf16.msra.mxu0 0
        %1648 = vmatpush.bf16.msra.mxu0 0
        %1649 = vmatpush.bf16.msra.mxu0 0
        %1650 = vmatpush.bf16.msra.mxu0 0
        %1651 = vmatpush.bf16.msra.mxu0 0
        %1652 = vmatpush.bf16.msra.mxu0 0
        %1653 = vmatpush.bf16.msra.mxu0 0
        %1654 = vmatpush.bf16.msra.mxu0 %v1645
        %1655 = vmatmul.bf16.gmra.mxu0 %v1642
        %v1656 = vpop.f32.mrf.mxu0
        %v1657 = vadd.f32 0.0, %v1656
        %v1658 = vpop.f32.mrf.mxu0
        %1659 = vdwg.mxu0
        %v1660 = vld [vmem:[%s8] sm:$0xff]
        %v1661 = vld [vmem:[%s8 + $0x8] sm:$0xff]
        %v1662 = vld [vmem:[%s8 + $0x10] sm:$0xff]
        %v1663 = vld [vmem:[%s8 + $0x18] sm:$0xff]
        %v1664 = vpack.c.bf16 %v1660, %v1660
        %v1665 = vpack.c.bf16 %v1661, %v1661
        %v1666 = vpack.c.bf16 %v1662, %v1662
        %v1667 = vpack.c.bf16 %v1663, %v1663
        %v1668 = vpack.c.bf16 %v1600, %v1600
        %v1669 = vpack.c.bf16 %v1619, %v1619
        %v1670 = vpack.c.bf16 %v1638, %v1638
        %v1671 = vpack.c.bf16 %v1657, %v1657
        %v1673 = vsel %vm1035, %v1668, 0
        %v1676 = vsel %vm1232, %v1664, 0
        %1678 = vmatpush.bf16.msra.mxu0 0
        %1679 = vmatpush.bf16.msra.mxu0 0
        %1680 = vmatpush.bf16.msra.mxu0 0
        %1681 = vmatpush.bf16.msra.mxu0 0
        %1682 = vmatpush.bf16.msra.mxu0 0
        %1683 = vmatpush.bf16.msra.mxu0 0
        %1684 = vmatpush.bf16.msra.mxu0 0
        %1685 = vmatpush.bf16.msra.mxu0 %v1676
        %1686 = vmatmul.bf16.gmra.mxu0 %v1673
        %v1687 = vpop.f32.mrf.mxu0
        %v1688 = vadd.f32 0.0, %v1687
        %v1689 = vpop.f32.mrf.mxu0
        %1690 = vdwg.mxu0
        %v1692 = vsel %vm1035, %v1669, 0
        %v1695 = vsel %vm1232, %v1665, 0
        %1697 = vmatpush.bf16.msra.mxu0 0
        %1698 = vmatpush.bf16.msra.mxu0 0
        %1699 = vmatpush.bf16.msra.mxu0 0
        %1700 = vmatpush.bf16.msra.mxu0 0
        %1701 = vmatpush.bf16.msra.mxu0 0
        %1702 = vmatpush.bf16.msra.mxu0 0
        %1703 = vmatpush.bf16.msra.mxu0 0
        %1704 = vmatpush.bf16.msra.mxu0 %v1695
        %1705 = vmatmul.bf16.gmra.mxu0 %v1692
        %v1706 = vpop.f32.mrf.mxu0
        %v1707 = vadd.f32 0.0, %v1706
        %v1708 = vpop.f32.mrf.mxu0
        %1709 = vdwg.mxu0
        %v1711 = vsel %vm1035, %v1670, 0
        %v1714 = vsel %vm1232, %v1666, 0
        %1716 = vmatpush.bf16.msra.mxu0 0
        %1717 = vmatpush.bf16.msra.mxu0 0
        %1718 = vmatpush.bf16.msra.mxu0 0
        %1719 = vmatpush.bf16.msra.mxu0 0
        %1720 = vmatpush.bf16.msra.mxu0 0
        %1721 = vmatpush.bf16.msra.mxu0 0
        %1722 = vmatpush.bf16.msra.mxu0 0
        %1723 = vmatpush.bf16.msra.mxu0 %v1714
        %1724 = vmatmul.bf16.gmra.mxu0 %v1711
        %v1725 = vpop.f32.mrf.mxu0
        %v1726 = vadd.f32 0.0, %v1725
        %v1727 = vpop.f32.mrf.mxu0
        %1728 = vdwg.mxu0
        %v1730 = vsel %vm1035, %v1671, 0
        %v1733 = vsel %vm1232, %v1667, 0
        %1735 = vmatpush.bf16.msra.mxu0 0
        %1736 = vmatpush.bf16.msra.mxu0 0
        %1737 = vmatpush.bf16.msra.mxu0 0
        %1738 = vmatpush.bf16.msra.mxu0 0
        %1739 = vmatpush.bf16.msra.mxu0 0
        %1740 = vmatpush.bf16.msra.mxu0 0
        %1741 = vmatpush.bf16.msra.mxu0 0
        %1742 = vmatpush.bf16.msra.mxu0 %v1733
        %1743 = vmatmul.bf16.gmra.mxu0 %v1730
        %v1744 = vpop.f32.mrf.mxu0
        %v1745 = vadd.f32 0.0, %v1744
        %v1746 = vpop.f32.mrf.mxu0
        %1747 = vdwg.mxu0
        %v1748 = vsel %vm729, %v1688, 0.0
        %v1749 = vsel %vm729, %v1707, 0.0
        %v1750 = vadd.f32 %v1748, %v1749
        %v1751 = vsel %vm729, %v1726, 0.0
        %v1752 = vadd.f32 %v1750, %v1751
        %v1753 = vsel %vm729, %v1745, 0.0
        %v1754 = vadd.f32 %v1752, %v1753
        %v1755 = vld [vmem:[%s9] sm:$0x1]
        %v1757 = vperm.slane %v1755, 0
        %v1759 = vadd.f32 %v1754, %v1757
        %v1760 = vadd.f32 %v631, %v1759
        %v1761 = vld [vmem:[%s10] sm:$0x1]
        %v1762 = vld [vmem:[%s11] sm:$0x1]
        %v1763 = vsel %vm729, %v1760, 0.0
        %1764 = vadd.xlane.f32.xlu0 %v1763
        %v1765 = vpop.xlane.xlu0 %1764
        %v1766 = vrcp.pop 32.0
        %v1767 = vmul.f32 32.0, %v1766
        %v1768 = vsub.f32 1.0, %v1767
        %v1769 = vmul.f32 %v1766, %v1768
        %v1770 = vadd.f32 %v1766, %v1769
        %vm1771 = vweird.f32 %v1766
        %v1772 = vsel %vm1771, %v1766, %v1770
        %v1773 = vmul.f32 %v1765, %v1772
        %v1774 = vsub.f32 %v1760, %v1773
        %v1775 = vmul.f32 %v1774, %v1774
        %v1776 = vsel %vm729, %v1775, 0.0
        %1777 = vadd.xlane.f32.xlu0 %v1776
        %v1778 = vpop.xlane.xlu0 %1777
        %v1779 = vmul.f32 %v1778, %v1772
        %v1780 = vadd.f32 %v1779, 1e-05
        %v1781 = vrsqrt.pop %v1780
        %v1782 = vmul.f32 %v1781, %v1780
        %v1783 = vmul.f32 %v1782, %v1781
        %v1784 = vmul.f32 0.5, %v1783
        %v1785 = vsub.f32 1.5, %v1784
        %v1786 = vmul.f32 %v1781, %v1785
        %vm1787 = vweird.f32 %v1780
        %vm1788 = vweird.f32 %v1781
        %vm1789 = vmor %vm1787, %vm1788
        %v1790 = vsel %vm1789, %v1781, %v1786
        %v1791 = vmul.f32 %v1774, %v1790
        %v1793 = vperm.slane %v1761, 0
        %v1795 = vmul.f32 %v1791, %v1793
        %v1797 = vperm.slane %v1762, 0
        %v1799 = vadd.f32 %v1795, %v1797
        %v1800 = vpack.c.bf16 %v1799, %v1799
        %v1801 = vld [vmem:[%s12] sm:$0xff]
        %v1802 = vld [vmem:[%s12 + $0x8] sm:$0xff]
        %v1803 = vld [vmem:[%s12 + $0x10] sm:$0xff]
        %v1804 = vld [vmem:[%s12 + $0x18] sm:$0xff]
        %v1805 = vpack.c.bf16 %v1802, %v1801
        %v1806 = vpack.c.bf16 %v1804, %v1803
        %v1807 = vld [vmem:[%s13] sm:$0x1]
        %v1809 = vperm.slane %v1807, 0
        %v1812 = vsel %vm729, %v1800, 0
        %1814 = vmatpush.bf16.msra.mxu0 0
        %1815 = vmatpush.bf16.msra.mxu0 0
        %1816 = vmatpush.bf16.msra.mxu0 0
        %1817 = vmatpush.bf16.msra.mxu0 0
        %1818 = vmatpush.bf16.msra.mxu0 0
        %1819 = vmatpush.bf16.msra.mxu0 0
        %1820 = vmatpush.bf16.msra.mxu0 %v1806
        %1821 = vmatpush.bf16.msra.mxu0 %v1805
        %1822 = vmatmul.bf16.gmra.mxu0 %v1812
        %v1823 = vpop.f32.mrf.mxu0
        %v1824 = vadd.f32 %v1809, %v1823
        %v1825 = vpop.f32.mrf.mxu0
        %1826 = vdwg.mxu0
        %v1827 = vmax.f32 %v1824, 0.0
        %v1828 = vpack.c.bf16 %v1827, %v1827
        %v1829 = vld [vmem:[%s14] sm:$0xff]
        %v1830 = vld [vmem:[%s14 + $0x8] sm:$0xff]
        %v1831 = vld [vmem:[%s14 + $0x10] sm:$0xff]
        %v1832 = vld [vmem:[%s14 + $0x18] sm:$0xff]
        %v1833 = vld [vmem:[%s14 + $0x20] sm:$0xff]
        %v1834 = vld [vmem:[%s14 + $0x28] sm:$0xff]
        %v1835 = vld [vmem:[%s14 + $0x30] sm:$0xff]
        %v1836 = vld [vmem:[%s14 + $0x38] sm:$0xff]
        %v1837 = vpack.c.bf16 %v1830, %v1829
        %v1838 = vpack.c.bf16 %v1832, %v1831
        %v1839 = vpack.c.bf16 %v1834, %v1833
        %v1840 = vpack.c.bf16 %v1836, %v1835
        %v1841 = vld [vmem:[%s15] sm:$0x1]
        %v1843 = vperm.slane %v1841, 0
        %vm1845 = vcmask 523264
        %v1847 = vsel %vm1845, %v1828, 0
        %1849 = vmatpush.bf16.msra.mxu0 0
        %1850 = vmatpush.bf16.msra.mxu0 0
        %1851 = vmatpush.bf16.msra.mxu0 0
        %1852 = vmatpush.bf16.msra.mxu0 0
        %1853 = vmatpush.bf16.msra.mxu0 %v1840
        %1854 = vmatpush.bf16.msra.mxu0 %v1839
        %1855 = vmatpush.bf16.msra.mxu0 %v1838
        %1856 = vmatpush.bf16.msra.mxu0 %v1837
        %1857 = vmatmul.bf16.gmra.mxu0 %v1847
        %v1858 = vpop.f32.mrf.mxu0
        %v1859 = vadd.f32 %v1843, %v1858
        %v1860 = vpop.f32.mrf.mxu0
        %1861 = vdwg.mxu0
        %v1862 = vadd.f32 %v1799, %v1859
        %v1863 = vld [vmem:[%s16] sm:$0x1]
        %v1864 = vld [vmem:[%s17] sm:$0x1]
        %v1865 = vsel %vm729, %v1862, 0.0
        %1866 = vadd.xlane.f32.xlu0 %v1865
        %v1867 = vpop.xlane.xlu0 %1866
        %v1868 = vmul.f32 %v1867, %v1772
        %v1869 = vsub.f32 %v1862, %v1868
        %v1870 = vmul.f32 %v1869, %v1869
        %v1871 = vsel %vm729, %v1870, 0.0
        %1872 = vadd.xlane.f32.xlu0 %v1871
        %v1873 = vpop.xlane.xlu0 %1872
        %v1874 = vmul.f32 %v1873, %v1772
        %v1875 = vadd.f32 %v1874, 1e-05
        %v1876 = vrsqrt.pop %v1875
        %v1877 = vmul.f32 %v1876, %v1875
        %v1878 = vmul.f32 %v1877, %v1876
        %v1879 = vmul.f32 0.5, %v1878
        %v1880 = vsub.f32 1.5, %v1879
        %v1881 = vmul.f32 %v1876, %v1880
        %vm1882 = vweird.f32 %v1875
        %vm1883 = vweird.f32 %v1876
        %vm1884 = vmor %vm1882, %vm1883
        %v1885 = vsel %vm1884, %v1876, %v1881
        %v1886 = vmul.f32 %v1869, %v1885
        %v1888 = vperm.slane %v1863, 0
        %v1890 = vmul.f32 %v1886, %v1888
        %v1892 = vperm.slane %v1864, 0
        %v1894 = vadd.f32 %v1890, %v1892
        %1895 = vst.msk [vmem:[%s614] sm:$0xff] %vm729, %v1894
        %s1896 = sand.u32 %s449, 1
        %s1897 = scalar_lea.sflag [#allocation3], %s1896
        %s1898 = sand.u32 %s449, 1
        %s1899 = smul.addr %s1898, 8
        %s1900 = scalar_lea.vmem [#allocation2], %s1899
        // Predicated region
        $region93: #{tpu_custom_call.1} parent=91 // pred_check
          %p1901 = pneg %p459
        $region94: #{tpu_custom_call.1} parent=91 // pred_check_branch
          %1903 = sbr.rel (%p1901) target = $region96
        $region95: #{tpu_custom_call.1} parent=91 // pred_region
          %1905 = vsyncadd %s1897, 0
          %s1906 = sadd.s32 %s37, %s36
          %s1907 = smul.addr %s1906, 8
          %s1908 = scalar_lea.hbm %s18, %s1907
          %s1910 = sshll.u32 %s1900, 4
          %s1911 = int_to_ptr.vmem [resolvable:$true] %s1910
          %s1912 = sshll.u32 %s1908, 4
          %s1913 = int_to_ptr.hbm [resolvable:$true] %s1912
          %1915 = dma.vmem_to_hbm [thread:$0]  %s1911, 128, %s1913, %s1897
        $region96: #{tpu_custom_call.1} parent=91 // pred_fallthru
          _
      $region92: #{tpu_custom_call.1} parent=5 // pred_fallthru
        _
      %p1916 = scmp.le.s32.totalorder 2, %s27
      // Predicated region
      $region97: #{tpu_custom_call.1} parent=5 // pred_check
        %p1917 = pneg %p1916
      $region98: #{tpu_custom_call.1} parent=5 // pred_check_branch
        %1919 = sbr.rel (%p1917) target = $region100
      $region99: #{tpu_custom_call.1} parent=5 // pred_region
        %s1920 = ssub.s32 %s27, 2
        // Predicated region
        $region101: #{tpu_custom_call.1} parent=99 // pred_check
          %p1921 = pneg %p465
        $region102: #{tpu_custom_call.1} parent=99 // pred_check_branch
          %1923 = sbr.rel (%p1921) target = $region104
        $region103: #{tpu_custom_call.1} parent=99 // pred_region
          %s1924 = sand.u32 %s450, 1
          %s1925 = scalar_lea.sflag [#allocation3], %s1924
          %s1926 = sand.u32 %s450, 1
          %s1927 = smul.addr %s1926, 8
          %s1928 = scalar_lea.vmem [#allocation2], %s1927
          %1930 = dma.done %s1925, 128
        $region104: #{tpu_custom_call.1} parent=99 // pred_fallthru
          _
      $region100: #{tpu_custom_call.1} parent=5 // pred_fallthru
        _
    $region6: #{tpu_custom_call.1} parent=1 // loop_footer
      %s31 = sadd.s32 1, %s27
    $region7: #{tpu_custom_call.1} parent=1 // loop_footer_branch
      %26 = sbr.rel target = $region3
    $region8: #{tpu_custom_call.1} parent=1 // loop_exit
      _
    %1931 = vsyncpa [#allocation3], 1
    %s1932 = scalar_lea.sflag [#allocation3], 1
    %1933 = vsyncpa %s1932, 1

</llo_original>
